<compile_context>
chip_gen: v7x
topology: tpu7x:2x2x1
jax: 0.10.0
libtpu: 0.0.40
codegen_flags: <defaults>
</compile_context>

<pallas_src>
import jax
import jax.numpy as jnp
import numpy as np
from jax.experimental import pallas as pl
from jax.experimental.pallas import tpu as pltpu


def _softmax_last(s):
    """Numerically stable softmax over the last axis, f32 in/out."""
    m = jnp.max(s, axis=-1, keepdims=True)
    e = jnp.exp(s - m)
    denom = jnp.sum(e, axis=-1, keepdims=True)
    return e * pl.reciprocal(denom, approx=True)


def _make_pattention_kernel(bb, nh, hd, p, nk, nq, c, scale):
    """bb: batches per grid step, nh: heads, hd: head dim, p: patches, nk: keys/patch,
    nq: query tokens, c: channels."""
    l = p * nk

    def kernel(xs_ref, xh_ref, wq_ref, wkv_ref, wp_ref, b_ref, out_ref):
        wq = wq_ref[...]          # (C, C)    bf16
        wkv = wkv_ref[...]        # (C, 2C)   bf16  (k = first C cols, v = last C)
        wp = wp_ref[...]          # (C, C)    bf16
        bias = b_ref[...]         # (1, C)    f32

        # Batch-flattened, lane-dense projections (leading-dim reshape is free).
        xq = xs_ref[...].reshape(bb * nq, c)            # (bb*nq, C) bf16
        xh = xh_ref[...].reshape(bb * l, c)             # (bb*l,  C) bf16
        q = jnp.dot(xq, wq, preferred_element_type=jnp.float32) * scale   # (bb*nq, C)
        kv = jnp.dot(xh, wkv, preferred_element_type=jnp.float32)         # (bb*l, 2C)
        q = q.astype(jnp.bfloat16)
        kv = kv.astype(jnp.bfloat16)

        # Per-head attention: tiny (nq x l) scores / softmax / ctx, batched over bb.
        head_cols = []
        for h in range(nh):       # static; nh is small
            lo = h * hd
            qh = q[:, lo:lo + hd].reshape(bb, nq, hd)           # (bb, nq, hd)
            kh = kv[:, lo:lo + hd].reshape(bb, l, hd)           # (bb, l,  hd)
            vh = kv[:, c + lo:c + lo + hd].reshape(bb, l, hd)   # (bb, l,  hd)
            s = jnp.einsum('bqd,bkd->bqk', qh, kh,
                           preferred_element_type=jnp.float32)  # (bb, nq, l) f32
            if p == 1:
                pr = _softmax_last(s)
            else:
                # Per-source-patch softmax (matches attn.softmax(dim=-1) on the
                # (.., p, Nq, Nk) score tensor).  The literal PyTorch forward only
                # runs for p == 1; this branch is kept for completeness.
                pr = _softmax_last(s.reshape(bb, nq, p, nk)).reshape(bb, nq, l)
            ctxh = jnp.einsum('bqk,bkd->bqd', pr.astype(jnp.bfloat16), vh,
                              preferred_element_type=jnp.float32)          # (bb, nq, hd)
            head_cols.append(ctxh.reshape(bb * nq, hd))

        # Merge heads along lanes, then one fused 128-deep output projection + bias.
        ctx = jnp.concatenate(head_cols, axis=-1).astype(jnp.bfloat16)     # (bb*nq, C)
        out = jnp.dot(ctx, wp, preferred_element_type=jnp.float32) + bias  # (bb*nq, C)
        out_ref[...] = out.reshape(bb, nq, c).astype(out_ref.dtype)

    return kernel


def _tensorcores_per_device():
    """2 on v7x (megacore via 'parallel' grid steps), 1 on v5e/v6e (or if unknown)."""
    try:
        info = pltpu.get_tpu_info()
        for attr in ("num_cores", "core_count", "num_tensorcores", "tensorcores_per_chip"):
            n = getattr(info, attr, None)
            if n:
                return int(n)
    except Exception:
        pass
    return 1


def pack_params(params):
    """One-time repack (call at init, NOT per forward): bf16 weights for the MXU,
    bias reshaped to (1, C) f32.  Weights stay in their natural (in, out) layout."""
    C = params['wq'].shape[0]
    return {
        'wq': params['wq'].astype(jnp.bfloat16),        # (C, C)
        'wkv': params['wkv'].astype(jnp.bfloat16),      # (C, 2C)
        'wproj': params['wproj'].astype(jnp.bfloat16),  # (C, C)
        'bproj': params['bproj'].reshape(1, C).astype(jnp.float32),
    }


def pattention_v2_forward(x_s, x_h, packed, num_heads, H=None, W=None):
    """Pallas forward for PAttention_V2.  H, W are unused (as in the reference)."""
    del H, W
    B, ps, nq_in, C = x_s.shape
    B2, p, nk, C2 = x_h.shape
    assert B == B2 and C == C2, "x_s / x_h batch or channel mismatch"
    assert C % num_heads == 0
    nh = num_heads
    hd = C // nh
    scale = float(hd) ** -0.5
    nq = ps * nq_in          # reference flattens x_s's patch axis into the token axis
    l = p * nk

    xs2 = x_s.reshape(B, nq, C).astype(jnp.bfloat16)
    xh2 = x_h.reshape(B, l, C).astype(jnp.bfloat16)

    # One grid step on single-TC chips; 2 "parallel" steps only when a second TC exists.
    G = 2 if (_tensorcores_per_device() >= 2 and B % 2 == 0) else 1
    BB = B // G

    # TODO(synk): at production Nq (= H*W) sizes, tile nq as an extra "parallel" grid
    # axis (256-512 row tiles) and set vmem_limit_bytes so tiles fit v7x's 64 MiB VMEM.
    kernel = _make_pattention_kernel(BB, nh, hd, p, nk, nq, C, scale)

    out = pl.pallas_call(
        kernel,
        grid_spec=pltpu.PrefetchScalarGridSpec(
            num_scalar_prefetch=0,
            grid=(G,),
            in_specs=[
                pl.BlockSpec((BB, nq, C), lambda g: (g, 0, 0)),
                pl.BlockSpec((BB, l, C), lambda g: (g, 0, 0)),
                # Constant-index weight blocks: fetched once, revisited across steps.
                pl.BlockSpec((C, C), lambda g: (0, 0)),
                pl.BlockSpec((C, 2 * C), lambda g: (0, 0)),
                pl.BlockSpec((C, C), lambda g: (0, 0)),
                pl.BlockSpec((1, C), lambda g: (0, 0)),
            ],
            out_specs=pl.BlockSpec((BB, nq, C), lambda g: (g, 0, 0)),
        ),
        out_shape=jax.ShapeDtypeStruct((B, nq, C), jnp.float32),
        compiler_params=pltpu.CompilerParams(dimension_semantics=("parallel",)),
    )(xs2, xh2, packed['wq'], packed['wkv'], packed['wproj'], packed['bproj'])
    return out


def _reference_forward(x_s, x_h, params, num_heads):
    """Pure-JAX f32 reference of the intended PAttention_V2 math (exact for p == 1)."""
    B, ps, nq_in, C = x_s.shape
    _, p, nk, _ = x_h.shape
    nh = num_heads
    hd = C // nh
    scale = float(hd) ** -0.5
    xq = x_s.reshape(B, ps * nq_in, C)
    xh = x_h.reshape(B, p * nk, C)
    q = xq @ params['wq']
    kv = xh @ params['wkv']
    k, v = kv[..., :C], kv[..., C:]
    q = q.reshape(B, -1, nh, hd).transpose(0, 2, 1, 3)                 # (B, nh, Nt, hd)
    k = k.reshape(B, p, nk, nh, hd).transpose(0, 3, 1, 2, 4)           # (B, nh, p, nk, hd)
    v = v.reshape(B, p, nk, nh, hd).transpose(0, 3, 1, 2, 4)
    attn = jnp.einsum('bhqd,bhpkd->bhpqk', q, k) * scale
    attn = jax.nn.softmax(attn, axis=-1)
    attn = attn.transpose(0, 1, 3, 2, 4).reshape(B, nh, q.shape[2], p * nk)
    vf = v.reshape(B, nh, p * nk, hd)
    out = jnp.einsum('bhqk,bhkd->bhqd', attn, vf)
    out = out.transpose(0, 2, 1, 3).reshape(B, -1, C)
    return out @ params['wproj'] + params['bproj']


def init_params(key, dim):
    # nn.Linear weights kept in (in_features, out_features) math layout so x @ W is
    # equivalent to torch's x @ weight.T; small-std init for a well-conditioned demo.
    std = 0.02
    k1, k2, k3, k4 = jax.random.split(key, 4)
    return {
        'wq': (std * jax.random.normal(k1, (dim, dim))).astype(jnp.float32),
        'wkv': (std * jax.random.normal(k2, (dim, 2 * dim))).astype(jnp.float32),
        'wproj': (std * jax.random.normal(k3, (dim, dim))).astype(jnp.float32),
        'bproj': (std * jax.random.normal(k4, (dim,))).astype(jnp.float32),
    }


if __name__ == "__main__":
    # dim=128, num_heads=8 (module default), num_patch p=1, 16 tokens, batch 2.
    B, p, N, C, NH = 2, 1, 16, 128, 8
    key = jax.random.PRNGKey(0)
    k_xs, k_xh, k_w = jax.random.split(key, 3)
    x_s = jax.random.normal(k_xs, (B, 1, N, C), jnp.float32)   # query tokens
    x_h = jax.random.normal(k_xh, (B, p, N, C), jnp.float32)   # per-patch key/value tokens
    params = init_params(k_w, C)
    packed = pack_params(params)    # one-time weight cast, off the per-forward hot path

    out = pattention_v2_forward(x_s, x_h, packed, NH)
    jax.block_until_ready(out)
    assert out.shape == (B, N, C)

    ref = _reference_forward(x_s, x_h, params, NH)
    np.testing.assert_allclose(np.asarray(out), np.asarray(ref), atol=1e-2, rtol=0)

    print("KERNEL_OK")
</pallas_src>

<mosaic_0001>
module attributes {stable_mosaic.version = 11 : i64} {
  func.func @kernel(%arg0: i32, %arg1: memref<2x16x128xbf16, #tpu.memory_space<vmem>>, %arg2: memref<2x16x128xbf16, #tpu.memory_space<vmem>>, %arg3: memref<128x128xbf16, #tpu.memory_space<vmem>>, %arg4: memref<128x256xbf16, #tpu.memory_space<vmem>>, %arg5: memref<128x128xbf16, #tpu.memory_space<vmem>>, %arg6: memref<1x128xf32, #tpu.memory_space<vmem>>, %arg7: memref<2x16x128xf32, #tpu.memory_space<vmem>>) attributes {dimension_semantics = [#tpu.dimension_semantics<parallel>], iteration_bounds = array<i64: 1>, scalar_prefetch = 0 : i64, scratch_operands = 0 : i64, tpu.core_type = #tpu.core_type<tc>, window_params = [{transform_indices = @transform_0, window_bounds = array<i64: 2, 16, 128>}, {transform_indices = @transform_1, window_bounds = array<i64: 2, 16, 128>}, {pipeline_mode = #tpu.pipeline_mode<synchronous>, transform_indices = @transform_2, window_bounds = array<i64: 128, 128>}, {pipeline_mode = #tpu.pipeline_mode<synchronous>, transform_indices = @transform_3, window_bounds = array<i64: 128, 256>}, {pipeline_mode = #tpu.pipeline_mode<synchronous>, transform_indices = @transform_4, window_bounds = array<i64: 128, 128>}, {pipeline_mode = #tpu.pipeline_mode<synchronous>, transform_indices = @transform_5, window_bounds = array<i64: 1, 128>}, {transform_indices = @transform_6, window_bounds = array<i64: 2, 16, 128>}]} {
    %c0 = arith.constant 0 : index
    %c0_0 = arith.constant 0 : index
    %0 = vector.load %arg3[%c0, %c0_0] : memref<128x128xbf16, #tpu.memory_space<vmem>>, vector<128x128xbf16>
    %c0_1 = arith.constant 0 : index
    %c0_2 = arith.constant 0 : index
    %1 = vector.load %arg4[%c0_1, %c0_2] : memref<128x256xbf16, #tpu.memory_space<vmem>>, vector<128x256xbf16>
    %c0_3 = arith.constant 0 : index
    %c0_4 = arith.constant 0 : index
    %2 = vector.load %arg5[%c0_3, %c0_4] : memref<128x128xbf16, #tpu.memory_space<vmem>>, vector<128x128xbf16>
    %c0_5 = arith.constant 0 : index
    %c0_6 = arith.constant 0 : index
    %3 = vector.load %arg6[%c0_5, %c0_6] : memref<1x128xf32, #tpu.memory_space<vmem>>, vector<1x128xf32>
    %c0_7 = arith.constant 0 : index
    %c0_8 = arith.constant 0 : index
    %c0_9 = arith.constant 0 : index
    %4 = vector.load %arg1[%c0_7, %c0_8, %c0_9] : memref<2x16x128xbf16, #tpu.memory_space<vmem>>, vector<2x16x128xbf16>
    %5 = vector.shape_cast %4 : vector<2x16x128xbf16> to vector<32x128xbf16>
    %c0_10 = arith.constant 0 : index
    %c0_11 = arith.constant 0 : index
    %c0_12 = arith.constant 0 : index
    %6 = vector.load %arg2[%c0_10, %c0_11, %c0_12] : memref<2x16x128xbf16, #tpu.memory_space<vmem>>, vector<2x16x128xbf16>
    %7 = vector.shape_cast %6 : vector<2x16x128xbf16> to vector<32x128xbf16>
    %cst = arith.constant dense<0.000000e+00> : vector<32x128xf32>
    %8 = tpu.matmul %5, %0, %cst {dimension_numbers = #tpu.dot_dimension_numbers<[1], [0], [0], [1], [0, 0, 1, 1], [], []>} : vector<32x128xbf16>, vector<128x128xbf16>, vector<32x128xf32> -> vector<32x128xf32>
    %cst_13 = arith.constant 2.500000e-01 : f32
    %9 = vector.broadcast %cst_13 : f32 to vector<32x128xf32>
    %10 = arith.mulf %8, %9 : vector<32x128xf32>
    %cst_14 = arith.constant dense<0.000000e+00> : vector<32x256xf32>
    %11 = tpu.matmul %7, %1, %cst_14 {dimension_numbers = #tpu.dot_dimension_numbers<[1], [0], [0], [1], [0, 0, 1, 1], [], []>} : vector<32x128xbf16>, vector<128x256xbf16>, vector<32x256xf32> -> vector<32x256xf32>
    %12 = arith.truncf %10 : vector<32x128xf32> to vector<32x128xbf16>
    %13 = arith.truncf %11 : vector<32x256xf32> to vector<32x256xbf16>
    %14 = vector.extract_strided_slice %12 {offsets = [0, 0], sizes = [32, 16], strides = [1, 1]} : vector<32x128xbf16> to vector<32x16xbf16>
    %15 = vector.shape_cast %14 : vector<32x16xbf16> to vector<2x16x16xbf16>
    %16 = vector.extract_strided_slice %13 {offsets = [0, 0], sizes = [32, 16], strides = [1, 1]} : vector<32x256xbf16> to vector<32x16xbf16>
    %17 = vector.shape_cast %16 : vector<32x16xbf16> to vector<2x16x16xbf16>
    %18 = vector.extract_strided_slice %13 {offsets = [0, 128], sizes = [32, 16], strides = [1, 1]} : vector<32x256xbf16> to vector<32x16xbf16>
    %19 = vector.shape_cast %18 : vector<32x16xbf16> to vector<2x16x16xbf16>
    "tpu.trace_start"() <{level = 10 : i32, message = "bqd,bkd->bqk"}> : () -> ()
    %cst_15 = arith.constant dense<0.000000e+00> : vector<2x16x16xf32>
    %20 = tpu.matmul %15, %17, %cst_15 {dimension_numbers = #tpu.dot_dimension_numbers<[2], [2], [1], [1], [0, 0, 0, 1, 1, 1], [0], [0]>} : vector<2x16x16xbf16>, vector<2x16x16xbf16>, vector<2x16x16xf32> -> vector<2x16x16xf32>
    "tpu.trace_stop"() : () -> ()
    %cst_16 = arith.constant dense<0xFF800000> : vector<2x16xf32>
    %21 = vector.multi_reduction <maximumf>, %20, %cst_16 [2] : vector<2x16x16xf32> to vector<2x16xf32>
    %22 = vector.shape_cast %21 : vector<2x16xf32> to vector<2x16x1xf32>
    %23 = vector.broadcast %22 : vector<2x16x1xf32> to vector<2x16x16xf32>
    %24 = arith.subf %20, %23 : vector<2x16x16xf32>
    %25 = math.exp %24 : vector<2x16x16xf32>
    %cst_17 = arith.constant dense<0.000000e+00> : vector<2x16xf32>
    %26 = vector.multi_reduction <add>, %25, %cst_17 [2] : vector<2x16x16xf32> to vector<2x16xf32>
    %27 = vector.shape_cast %26 : vector<2x16xf32> to vector<2x16x1xf32>
    %28 = tpu.reciprocal %27 {approx = true} : vector<2x16x1xf32> -> vector<2x16x1xf32>
    %29 = vector.broadcast %28 : vector<2x16x1xf32> to vector<2x16x16xf32>
    %30 = arith.mulf %25, %29 : vector<2x16x16xf32>
    %31 = arith.truncf %30 : vector<2x16x16xf32> to vector<2x16x16xbf16>
    "tpu.trace_start"() <{level = 10 : i32, message = "bqk,bkd->bqd"}> : () -> ()
    %cst_18 = arith.constant dense<0.000000e+00> : vector<2x16x16xf32>
    %32 = tpu.matmul %31, %19, %cst_18 {dimension_numbers = #tpu.dot_dimension_numbers<[2], [1], [1], [2], [0, 0, 0, 1, 1, 2], [0], [0]>} : vector<2x16x16xbf16>, vector<2x16x16xbf16>, vector<2x16x16xf32> -> vector<2x16x16xf32>
    "tpu.trace_stop"() : () -> ()
    %33 = vector.shape_cast %32 : vector<2x16x16xf32> to vector<32x16xf32>
    %34 = vector.extract_strided_slice %12 {offsets = [0, 16], sizes = [32, 16], strides = [1, 1]} : vector<32x128xbf16> to vector<32x16xbf16>
    %35 = vector.shape_cast %34 : vector<32x16xbf16> to vector<2x16x16xbf16>
    %36 = vector.extract_strided_slice %13 {offsets = [0, 16], sizes = [32, 16], strides = [1, 1]} : vector<32x256xbf16> to vector<32x16xbf16>
    %37 = vector.shape_cast %36 : vector<32x16xbf16> to vector<2x16x16xbf16>
    %38 = vector.extract_strided_slice %13 {offsets = [0, 144], sizes = [32, 16], strides = [1, 1]} : vector<32x256xbf16> to vector<32x16xbf16>
    %39 = vector.shape_cast %38 : vector<32x16xbf16> to vector<2x16x16xbf16>
    "tpu.trace_start"() <{level = 10 : i32, message = "bqd,bkd->bqk"}> : () -> ()
    %cst_19 = arith.constant dense<0.000000e+00> : vector<2x16x16xf32>
    %40 = tpu.matmul %35, %37, %cst_19 {dimension_numbers = #tpu.dot_dimension_numbers<[2], [2], [1], [1], [0, 0, 0, 1, 1, 1], [0], [0]>} : vector<2x16x16xbf16>, vector<2x16x16xbf16>, vector<2x16x16xf32> -> vector<2x16x16xf32>
    "tpu.trace_stop"() : () -> ()
    %cst_20 = arith.constant dense<0xFF800000> : vector<2x16xf32>
    %41 = vector.multi_reduction <maximumf>, %40, %cst_20 [2] : vector<2x16x16xf32> to vector<2x16xf32>
    %42 = vector.shape_cast %41 : vector<2x16xf32> to vector<2x16x1xf32>
    %43 = vector.broadcast %42 : vector<2x16x1xf32> to vector<2x16x16xf32>
    %44 = arith.subf %40, %43 : vector<2x16x16xf32>
    %45 = math.exp %44 : vector<2x16x16xf32>
    %cst_21 = arith.constant dense<0.000000e+00> : vector<2x16xf32>
    %46 = vector.multi_reduction <add>, %45, %cst_21 [2] : vector<2x16x16xf32> to vector<2x16xf32>
    %47 = vector.shape_cast %46 : vector<2x16xf32> to vector<2x16x1xf32>
    %48 = tpu.reciprocal %47 {approx = true} : vector<2x16x1xf32> -> vector<2x16x1xf32>
    %49 = vector.broadcast %48 : vector<2x16x1xf32> to vector<2x16x16xf32>
    %50 = arith.mulf %45, %49 : vector<2x16x16xf32>
    %51 = arith.truncf %50 : vector<2x16x16xf32> to vector<2x16x16xbf16>
    "tpu.trace_start"() <{level = 10 : i32, message = "bqk,bkd->bqd"}> : () -> ()
    %cst_22 = arith.constant dense<0.000000e+00> : vector<2x16x16xf32>
    %52 = tpu.matmul %51, %39, %cst_22 {dimension_numbers = #tpu.dot_dimension_numbers<[2], [1], [1], [2], [0, 0, 0, 1, 1, 2], [0], [0]>} : vector<2x16x16xbf16>, vector<2x16x16xbf16>, vector<2x16x16xf32> -> vector<2x16x16xf32>
    "tpu.trace_stop"() : () -> ()
    %53 = vector.shape_cast %52 : vector<2x16x16xf32> to vector<32x16xf32>
    %54 = vector.extract_strided_slice %12 {offsets = [0, 32], sizes = [32, 16], strides = [1, 1]} : vector<32x128xbf16> to vector<32x16xbf16>
    %55 = vector.shape_cast %54 : vector<32x16xbf16> to vector<2x16x16xbf16>
    %56 = vector.extract_strided_slice %13 {offsets = [0, 32], sizes = [32, 16], strides = [1, 1]} : vector<32x256xbf16> to vector<32x16xbf16>
    %57 = vector.shape_cast %56 : vector<32x16xbf16> to vector<2x16x16xbf16>
    %58 = vector.extract_strided_slice %13 {offsets = [0, 160], sizes = [32, 16], strides = [1, 1]} : vector<32x256xbf16> to vector<32x16xbf16>
    %59 = vector.shape_cast %58 : vector<32x16xbf16> to vector<2x16x16xbf16>
    "tpu.trace_start"() <{level = 10 : i32, message = "bqd,bkd->bqk"}> : () -> ()
    %cst_23 = arith.constant dense<0.000000e+00> : vector<2x16x16xf32>
    %60 = tpu.matmul %55, %57, %cst_23 {dimension_numbers = #tpu.dot_dimension_numbers<[2], [2], [1], [1], [0, 0, 0, 1, 1, 1], [0], [0]>} : vector<2x16x16xbf16>, vector<2x16x16xbf16>, vector<2x16x16xf32> -> vector<2x16x16xf32>
    "tpu.trace_stop"() : () -> ()
    %cst_24 = arith.constant dense<0xFF800000> : vector<2x16xf32>
    %61 = vector.multi_reduction <maximumf>, %60, %cst_24 [2] : vector<2x16x16xf32> to vector<2x16xf32>
    %62 = vector.shape_cast %61 : vector<2x16xf32> to vector<2x16x1xf32>
    %63 = vector.broadcast %62 : vector<2x16x1xf32> to vector<2x16x16xf32>
    %64 = arith.subf %60, %63 : vector<2x16x16xf32>
    %65 = math.exp %64 : vector<2x16x16xf32>
    %cst_25 = arith.constant dense<0.000000e+00> : vector<2x16xf32>
    %66 = vector.multi_reduction <add>, %65, %cst_25 [2] : vector<2x16x16xf32> to vector<2x16xf32>
    %67 = vector.shape_cast %66 : vector<2x16xf32> to vector<2x16x1xf32>
    %68 = tpu.reciprocal %67 {approx = true} : vector<2x16x1xf32> -> vector<2x16x1xf32>
    %69 = vector.broadcast %68 : vector<2x16x1xf32> to vector<2x16x16xf32>
    %70 = arith.mulf %65, %69 : vector<2x16x16xf32>
    %71 = arith.truncf %70 : vector<2x16x16xf32> to vector<2x16x16xbf16>
    "tpu.trace_start"() <{level = 10 : i32, message = "bqk,bkd->bqd"}> : () -> ()
    %cst_26 = arith.constant dense<0.000000e+00> : vector<2x16x16xf32>
    %72 = tpu.matmul %71, %59, %cst_26 {dimension_numbers = #tpu.dot_dimension_numbers<[2], [1], [1], [2], [0, 0, 0, 1, 1, 2], [0], [0]>} : vector<2x16x16xbf16>, vector<2x16x16xbf16>, vector<2x16x16xf32> -> vector<2x16x16xf32>
    "tpu.trace_stop"() : () -> ()
    %73 = vector.shape_cast %72 : vector<2x16x16xf32> to vector<32x16xf32>
    %74 = vector.extract_strided_slice %12 {offsets = [0, 48], sizes = [32, 16], strides = [1, 1]} : vector<32x128xbf16> to vector<32x16xbf16>
    %75 = vector.shape_cast %74 : vector<32x16xbf16> to vector<2x16x16xbf16>
    %76 = vector.extract_strided_slice %13 {offsets = [0, 48], sizes = [32, 16], strides = [1, 1]} : vector<32x256xbf16> to vector<32x16xbf16>
    %77 = vector.shape_cast %76 : vector<32x16xbf16> to vector<2x16x16xbf16>
    %78 = vector.extract_strided_slice %13 {offsets = [0, 176], sizes = [32, 16], strides = [1, 1]} : vector<32x256xbf16> to vector<32x16xbf16>
    %79 = vector.shape_cast %78 : vector<32x16xbf16> to vector<2x16x16xbf16>
    "tpu.trace_start"() <{level = 10 : i32, message = "bqd,bkd->bqk"}> : () -> ()
    %cst_27 = arith.constant dense<0.000000e+00> : vector<2x16x16xf32>
    %80 = tpu.matmul %75, %77, %cst_27 {dimension_numbers = #tpu.dot_dimension_numbers<[2], [2], [1], [1], [0, 0, 0, 1, 1, 1], [0], [0]>} : vector<2x16x16xbf16>, vector<2x16x16xbf16>, vector<2x16x16xf32> -> vector<2x16x16xf32>
    "tpu.trace_stop"() : () -> ()
    %cst_28 = arith.constant dense<0xFF800000> : vector<2x16xf32>
    %81 = vector.multi_reduction <maximumf>, %80, %cst_28 [2] : vector<2x16x16xf32> to vector<2x16xf32>
    %82 = vector.shape_cast %81 : vector<2x16xf32> to vector<2x16x1xf32>
    %83 = vector.broadcast %82 : vector<2x16x1xf32> to vector<2x16x16xf32>
    %84 = arith.subf %80, %83 : vector<2x16x16xf32>
    %85 = math.exp %84 : vector<2x16x16xf32>
    %cst_29 = arith.constant dense<0.000000e+00> : vector<2x16xf32>
    %86 = vector.multi_reduction <add>, %85, %cst_29 [2] : vector<2x16x16xf32> to vector<2x16xf32>
    %87 = vector.shape_cast %86 : vector<2x16xf32> to vector<2x16x1xf32>
    %88 = tpu.reciprocal %87 {approx = true} : vector<2x16x1xf32> -> vector<2x16x1xf32>
    %89 = vector.broadcast %88 : vector<2x16x1xf32> to vector<2x16x16xf32>
    %90 = arith.mulf %85, %89 : vector<2x16x16xf32>
    %91 = arith.truncf %90 : vector<2x16x16xf32> to vector<2x16x16xbf16>
    "tpu.trace_start"() <{level = 10 : i32, message = "bqk,bkd->bqd"}> : () -> ()
    %cst_30 = arith.constant dense<0.000000e+00> : vector<2x16x16xf32>
    %92 = tpu.matmul %91, %79, %cst_30 {dimension_numbers = #tpu.dot_dimension_numbers<[2], [1], [1], [2], [0, 0, 0, 1, 1, 2], [0], [0]>} : vector<2x16x16xbf16>, vector<2x16x16xbf16>, vector<2x16x16xf32> -> vector<2x16x16xf32>
    "tpu.trace_stop"() : () -> ()
    %93 = vector.shape_cast %92 : vector<2x16x16xf32> to vector<32x16xf32>
    %94 = vector.extract_strided_slice %12 {offsets = [0, 64], sizes = [32, 16], strides = [1, 1]} : vector<32x128xbf16> to vector<32x16xbf16>
    %95 = vector.shape_cast %94 : vector<32x16xbf16> to vector<2x16x16xbf16>
    %96 = vector.extract_strided_slice %13 {offsets = [0, 64], sizes = [32, 16], strides = [1, 1]} : vector<32x256xbf16> to vector<32x16xbf16>
    %97 = vector.shape_cast %96 : vector<32x16xbf16> to vector<2x16x16xbf16>
    %98 = vector.extract_strided_slice %13 {offsets = [0, 192], sizes = [32, 16], strides = [1, 1]} : vector<32x256xbf16> to vector<32x16xbf16>
    %99 = vector.shape_cast %98 : vector<32x16xbf16> to vector<2x16x16xbf16>
    "tpu.trace_start"() <{level = 10 : i32, message = "bqd,bkd->bqk"}> : () -> ()
    %cst_31 = arith.constant dense<0.000000e+00> : vector<2x16x16xf32>
    %100 = tpu.matmul %95, %97, %cst_31 {dimension_numbers = #tpu.dot_dimension_numbers<[2], [2], [1], [1], [0, 0, 0, 1, 1, 1], [0], [0]>} : vector<2x16x16xbf16>, vector<2x16x16xbf16>, vector<2x16x16xf32> -> vector<2x16x16xf32>
    "tpu.trace_stop"() : () -> ()
    %cst_32 = arith.constant dense<0xFF800000> : vector<2x16xf32>
    %101 = vector.multi_reduction <maximumf>, %100, %cst_32 [2] : vector<2x16x16xf32> to vector<2x16xf32>
    %102 = vector.shape_cast %101 : vector<2x16xf32> to vector<2x16x1xf32>
    %103 = vector.broadcast %102 : vector<2x16x1xf32> to vector<2x16x16xf32>
    %104 = arith.subf %100, %103 : vector<2x16x16xf32>
    %105 = math.exp %104 : vector<2x16x16xf32>
    %cst_33 = arith.constant dense<0.000000e+00> : vector<2x16xf32>
    %106 = vector.multi_reduction <add>, %105, %cst_33 [2] : vector<2x16x16xf32> to vector<2x16xf32>
    %107 = vector.shape_cast %106 : vector<2x16xf32> to vector<2x16x1xf32>
    %108 = tpu.reciprocal %107 {approx = true} : vector<2x16x1xf32> -> vector<2x16x1xf32>
    %109 = vector.broadcast %108 : vector<2x16x1xf32> to vector<2x16x16xf32>
    %110 = arith.mulf %105, %109 : vector<2x16x16xf32>
    %111 = arith.truncf %110 : vector<2x16x16xf32> to vector<2x16x16xbf16>
    "tpu.trace_start"() <{level = 10 : i32, message = "bqk,bkd->bqd"}> : () -> ()
    %cst_34 = arith.constant dense<0.000000e+00> : vector<2x16x16xf32>
    %112 = tpu.matmul %111, %99, %cst_34 {dimension_numbers = #tpu.dot_dimension_numbers<[2], [1], [1], [2], [0, 0, 0, 1, 1, 2], [0], [0]>} : vector<2x16x16xbf16>, vector<2x16x16xbf16>, vector<2x16x16xf32> -> vector<2x16x16xf32>
    "tpu.trace_stop"() : () -> ()
    %113 = vector.shape_cast %112 : vector<2x16x16xf32> to vector<32x16xf32>
    %114 = vector.extract_strided_slice %12 {offsets = [0, 80], sizes = [32, 16], strides = [1, 1]} : vector<32x128xbf16> to vector<32x16xbf16>
    %115 = vector.shape_cast %114 : vector<32x16xbf16> to vector<2x16x16xbf16>
    %116 = vector.extract_strided_slice %13 {offsets = [0, 80], sizes = [32, 16], strides = [1, 1]} : vector<32x256xbf16> to vector<32x16xbf16>
    %117 = vector.shape_cast %116 : vector<32x16xbf16> to vector<2x16x16xbf16>
    %118 = vector.extract_strided_slice %13 {offsets = [0, 208], sizes = [32, 16], strides = [1, 1]} : vector<32x256xbf16> to vector<32x16xbf16>
    %119 = vector.shape_cast %118 : vector<32x16xbf16> to vector<2x16x16xbf16>
    "tpu.trace_start"() <{level = 10 : i32, message = "bqd,bkd->bqk"}> : () -> ()
    %cst_35 = arith.constant dense<0.000000e+00> : vector<2x16x16xf32>
    %120 = tpu.matmul %115, %117, %cst_35 {dimension_numbers = #tpu.dot_dimension_numbers<[2], [2], [1], [1], [0, 0, 0, 1, 1, 1], [0], [0]>} : vector<2x16x16xbf16>, vector<2x16x16xbf16>, vector<2x16x16xf32> -> vector<2x16x16xf32>
    "tpu.trace_stop"() : () -> ()
    %cst_36 = arith.constant dense<0xFF800000> : vector<2x16xf32>
    %121 = vector.multi_reduction <maximumf>, %120, %cst_36 [2] : vector<2x16x16xf32> to vector<2x16xf32>
    %122 = vector.shape_cast %121 : vector<2x16xf32> to vector<2x16x1xf32>
    %123 = vector.broadcast %122 : vector<2x16x1xf32> to vector<2x16x16xf32>
    %124 = arith.subf %120, %123 : vector<2x16x16xf32>
    %125 = math.exp %124 : vector<2x16x16xf32>
    %cst_37 = arith.constant dense<0.000000e+00> : vector<2x16xf32>
    %126 = vector.multi_reduction <add>, %125, %cst_37 [2] : vector<2x16x16xf32> to vector<2x16xf32>
    %127 = vector.shape_cast %126 : vector<2x16xf32> to vector<2x16x1xf32>
    %128 = tpu.reciprocal %127 {approx = true} : vector<2x16x1xf32> -> vector<2x16x1xf32>
    %129 = vector.broadcast %128 : vector<2x16x1xf32> to vector<2x16x16xf32>
    %130 = arith.mulf %125, %129 : vector<2x16x16xf32>
    %131 = arith.truncf %130 : vector<2x16x16xf32> to vector<2x16x16xbf16>
    "tpu.trace_start"() <{level = 10 : i32, message = "bqk,bkd->bqd"}> : () -> ()
    %cst_38 = arith.constant dense<0.000000e+00> : vector<2x16x16xf32>
    %132 = tpu.matmul %131, %119, %cst_38 {dimension_numbers = #tpu.dot_dimension_numbers<[2], [1], [1], [2], [0, 0, 0, 1, 1, 2], [0], [0]>} : vector<2x16x16xbf16>, vector<2x16x16xbf16>, vector<2x16x16xf32> -> vector<2x16x16xf32>
    "tpu.trace_stop"() : () -> ()
    %133 = vector.shape_cast %132 : vector<2x16x16xf32> to vector<32x16xf32>
    %134 = vector.extract_strided_slice %12 {offsets = [0, 96], sizes = [32, 16], strides = [1, 1]} : vector<32x128xbf16> to vector<32x16xbf16>
    %135 = vector.shape_cast %134 : vector<32x16xbf16> to vector<2x16x16xbf16>
    %136 = vector.extract_strided_slice %13 {offsets = [0, 96], sizes = [32, 16], strides = [1, 1]} : vector<32x256xbf16> to vector<32x16xbf16>
    %137 = vector.shape_cast %136 : vector<32x16xbf16> to vector<2x16x16xbf16>
    %138 = vector.extract_strided_slice %13 {offsets = [0, 224], sizes = [32, 16], strides = [1, 1]} : vector<32x256xbf16> to vector<32x16xbf16>
    %139 = vector.shape_cast %138 : vector<32x16xbf16> to vector<2x16x16xbf16>
    "tpu.trace_start"() <{level = 10 : i32, message = "bqd,bkd->bqk"}> : () -> ()
    %cst_39 = arith.constant dense<0.000000e+00> : vector<2x16x16xf32>
    %140 = tpu.matmul %135, %137, %cst_39 {dimension_numbers = #tpu.dot_dimension_numbers<[2], [2], [1], [1], [0, 0, 0, 1, 1, 1], [0], [0]>} : vector<2x16x16xbf16>, vector<2x16x16xbf16>, vector<2x16x16xf32> -> vector<2x16x16xf32>
    "tpu.trace_stop"() : () -> ()
    %cst_40 = arith.constant dense<0xFF800000> : vector<2x16xf32>
    %141 = vector.multi_reduction <maximumf>, %140, %cst_40 [2] : vector<2x16x16xf32> to vector<2x16xf32>
    %142 = vector.shape_cast %141 : vector<2x16xf32> to vector<2x16x1xf32>
    %143 = vector.broadcast %142 : vector<2x16x1xf32> to vector<2x16x16xf32>
    %144 = arith.subf %140, %143 : vector<2x16x16xf32>
    %145 = math.exp %144 : vector<2x16x16xf32>
    %cst_41 = arith.constant dense<0.000000e+00> : vector<2x16xf32>
    %146 = vector.multi_reduction <add>, %145, %cst_41 [2] : vector<2x16x16xf32> to vector<2x16xf32>
    %147 = vector.shape_cast %146 : vector<2x16xf32> to vector<2x16x1xf32>
    %148 = tpu.reciprocal %147 {approx = true} : vector<2x16x1xf32> -> vector<2x16x1xf32>
    %149 = vector.broadcast %148 : vector<2x16x1xf32> to vector<2x16x16xf32>
    %150 = arith.mulf %145, %149 : vector<2x16x16xf32>
    %151 = arith.truncf %150 : vector<2x16x16xf32> to vector<2x16x16xbf16>
    "tpu.trace_start"() <{level = 10 : i32, message = "bqk,bkd->bqd"}> : () -> ()
    %cst_42 = arith.constant dense<0.000000e+00> : vector<2x16x16xf32>
    %152 = tpu.matmul %151, %139, %cst_42 {dimension_numbers = #tpu.dot_dimension_numbers<[2], [1], [1], [2], [0, 0, 0, 1, 1, 2], [0], [0]>} : vector<2x16x16xbf16>, vector<2x16x16xbf16>, vector<2x16x16xf32> -> vector<2x16x16xf32>
    "tpu.trace_stop"() : () -> ()
    %153 = vector.shape_cast %152 : vector<2x16x16xf32> to vector<32x16xf32>
    %154 = vector.extract_strided_slice %12 {offsets = [0, 112], sizes = [32, 16], strides = [1, 1]} : vector<32x128xbf16> to vector<32x16xbf16>
    %155 = vector.shape_cast %154 : vector<32x16xbf16> to vector<2x16x16xbf16>
    %156 = vector.extract_strided_slice %13 {offsets = [0, 112], sizes = [32, 16], strides = [1, 1]} : vector<32x256xbf16> to vector<32x16xbf16>
    %157 = vector.shape_cast %156 : vector<32x16xbf16> to vector<2x16x16xbf16>
    %158 = vector.extract_strided_slice %13 {offsets = [0, 240], sizes = [32, 16], strides = [1, 1]} : vector<32x256xbf16> to vector<32x16xbf16>
    %159 = vector.shape_cast %158 : vector<32x16xbf16> to vector<2x16x16xbf16>
    "tpu.trace_start"() <{level = 10 : i32, message = "bqd,bkd->bqk"}> : () -> ()
    %cst_43 = arith.constant dense<0.000000e+00> : vector<2x16x16xf32>
    %160 = tpu.matmul %155, %157, %cst_43 {dimension_numbers = #tpu.dot_dimension_numbers<[2], [2], [1], [1], [0, 0, 0, 1, 1, 1], [0], [0]>} : vector<2x16x16xbf16>, vector<2x16x16xbf16>, vector<2x16x16xf32> -> vector<2x16x16xf32>
    "tpu.trace_stop"() : () -> ()
    %cst_44 = arith.constant dense<0xFF800000> : vector<2x16xf32>
    %161 = vector.multi_reduction <maximumf>, %160, %cst_44 [2] : vector<2x16x16xf32> to vector<2x16xf32>
    %162 = vector.shape_cast %161 : vector<2x16xf32> to vector<2x16x1xf32>
    %163 = vector.broadcast %162 : vector<2x16x1xf32> to vector<2x16x16xf32>
    %164 = arith.subf %160, %163 : vector<2x16x16xf32>
    %165 = math.exp %164 : vector<2x16x16xf32>
    %cst_45 = arith.constant dense<0.000000e+00> : vector<2x16xf32>
    %166 = vector.multi_reduction <add>, %165, %cst_45 [2] : vector<2x16x16xf32> to vector<2x16xf32>
    %167 = vector.shape_cast %166 : vector<2x16xf32> to vector<2x16x1xf32>
    %168 = tpu.reciprocal %167 {approx = true} : vector<2x16x1xf32> -> vector<2x16x1xf32>
    %169 = vector.broadcast %168 : vector<2x16x1xf32> to vector<2x16x16xf32>
    %170 = arith.mulf %165, %169 : vector<2x16x16xf32>
    %171 = arith.truncf %170 : vector<2x16x16xf32> to vector<2x16x16xbf16>
    "tpu.trace_start"() <{level = 10 : i32, message = "bqk,bkd->bqd"}> : () -> ()
    %cst_46 = arith.constant dense<0.000000e+00> : vector<2x16x16xf32>
    %172 = tpu.matmul %171, %159, %cst_46 {dimension_numbers = #tpu.dot_dimension_numbers<[2], [1], [1], [2], [0, 0, 0, 1, 1, 2], [0], [0]>} : vector<2x16x16xbf16>, vector<2x16x16xbf16>, vector<2x16x16xf32> -> vector<2x16x16xf32>
    "tpu.trace_stop"() : () -> ()
    %173 = vector.shape_cast %172 : vector<2x16x16xf32> to vector<32x16xf32>
    %174 = tpu.concatenate %33, %53, %73, %93, %113, %133, %153, %173 in 1 : vector<32x16xf32>, vector<32x16xf32>, vector<32x16xf32>, vector<32x16xf32>, vector<32x16xf32>, vector<32x16xf32>, vector<32x16xf32>, vector<32x16xf32> -> vector<32x128xf32>
    %175 = arith.truncf %174 : vector<32x128xf32> to vector<32x128xbf16>
    %cst_47 = arith.constant dense<0.000000e+00> : vector<32x128xf32>
    %176 = tpu.matmul %175, %2, %cst_47 {dimension_numbers = #tpu.dot_dimension_numbers<[1], [0], [0], [1], [0, 0, 1, 1], [], []>} : vector<32x128xbf16>, vector<128x128xbf16>, vector<32x128xf32> -> vector<32x128xf32>
    %177 = vector.broadcast %3 : vector<1x128xf32> to vector<32x128xf32>
    %178 = arith.addf %176, %177 : vector<32x128xf32>
    %179 = vector.shape_cast %178 : vector<32x128xf32> to vector<2x16x128xf32>
    %c0_48 = arith.constant 0 : index
    %c0_49 = arith.constant 0 : index
    %c0_50 = arith.constant 0 : index
    %180 = vector.load %arg7[%c0_48, %c0_49, %c0_50] : memref<2x16x128xf32, #tpu.memory_space<vmem>>, vector<2x16x128xf32>
    tpu.vector_store %arg7[%c0_48, %c0_49, %c0_50], %179 {strides = array<i32>} : memref<2x16x128xf32, #tpu.memory_space<vmem>>, vector<2x16x128xf32>,
    return
  }
  func.func @transform_0(%arg0: i32) -> (i32, i32, i32) {
    %c0_i32 = arith.constant 0 : i32
    %c0_i32_0 = arith.constant 0 : i32
    %c0_i32_1 = arith.constant 0 : i32
    return %arg0, %c0_i32, %c0_i32_0 : i32, i32, i32
  }
  func.func @transform_1(%arg0: i32) -> (i32, i32, i32) {
    %c0_i32 = arith.constant 0 : i32
    %c0_i32_0 = arith.constant 0 : i32
    %c0_i32_1 = arith.constant 0 : i32
    return %arg0, %c0_i32, %c0_i32_0 : i32, i32, i32
  }
  func.func @transform_2(%arg0: i32) -> (i32, i32) {
    %c0_i32 = arith.constant 0 : i32
    %c0_i32_0 = arith.constant 0 : i32
    %c0_i32_1 = arith.constant 0 : i32
    return %c0_i32, %c0_i32_0 : i32, i32
  }
  func.func @transform_3(%arg0: i32) -> (i32, i32) {
    %c0_i32 = arith.constant 0 : i32
    %c0_i32_0 = arith.constant 0 : i32
    %c0_i32_1 = arith.constant 0 : i32
    return %c0_i32, %c0_i32_0 : i32, i32
  }
  func.func @transform_4(%arg0: i32) -> (i32, i32) {
    %c0_i32 = arith.constant 0 : i32
    %c0_i32_0 = arith.constant 0 : i32
    %c0_i32_1 = arith.constant 0 : i32
    return %c0_i32, %c0_i32_0 : i32, i32
  }
  func.func @transform_5(%arg0: i32) -> (i32, i32) {
    %c0_i32 = arith.constant 0 : i32
    %c0_i32_0 = arith.constant 0 : i32
    %c0_i32_1 = arith.constant 0 : i32
    return %c0_i32, %c0_i32_0 : i32, i32
  }
  func.func @transform_6(%arg0: i32) -> (i32, i32, i32) {
    %c0_i32 = arith.constant 0 : i32
    %c0_i32_0 = arith.constant 0 : i32
    %c0_i32_1 = arith.constant 0 : i32
    return %arg0, %c0_i32, %c0_i32_0 : i32, i32, i32
  }
}

</mosaic_0001>

<llo_original>
// kernel: tpu_custom_call.1
$region0: #{tpu_custom_call.1}
  #allocation0 [shape = 'u32[]', space=smem, size = 0x4, offset = 0x4, fixed_abs, tag = 'smem constant byte address 0x4 - core index']
  #allocation1 [shape = 'u32[144,128]{1,0:T(1,128)}', space=vmem, size = 0x12000, scoped, tag = 'internal scratch']
  %s0 = inlined_call_operand.hbm [shape: bf16[2,16,128], index: 0, kind: input, shape index: {}]
  %s1 = inlined_call_operand.hbm [shape: bf16[2,16,128], index: 1, kind: input, shape index: {}]
  %s2 = inlined_call_operand.hbm [shape: bf16[128,128], index: 2, kind: input, shape index: {}]
  %s3 = inlined_call_operand.hbm [shape: bf16[128,256], index: 3, kind: input, shape index: {}]
  %s4 = inlined_call_operand.hbm [shape: bf16[128,128], index: 4, kind: input, shape index: {}]
  %s5 = inlined_call_operand.vmem [shape: f32[1,128], index: 5, kind: input, shape index: {}]
  %s6 = inlined_call_operand.hbm [shape: f32[2,16,128], index: 6, kind: output, shape index: {}]
  %s7 = sld [smem:[#allocation0]]
  $region54: #{tpu_custom_call.1} parent=0
    _
  %s9 = ssub.s32 1, %s7
  %s10 = scalar_select 0, %s9, %s7
  $region1: #{tpu_custom_call.1} parent=0
    #allocation2 [shape = 'u8[8192]{0}', space=vmem, size = 0x2000, scoped, tag = 'input window, operand 0, single buffered']
    #allocation3 [shape = 's32[1]{0}', space=sflag, size = 0x4, scoped, tag = 'scoped memory for tpu_custom_call.1']
    #allocation4 [shape = 's32[1]{0}', space=sflag, size = 0x4, scoped, tag = 'scoped memory for tpu_custom_call.1']
    #allocation5 [shape = 'u8[8192]{0}', space=vmem, size = 0x2000, scoped, tag = 'input window, operand 1, single buffered']
    #allocation6 [shape = 's32[1]{0}', space=sflag, size = 0x4, scoped, tag = 'scoped memory for tpu_custom_call.1']
    #allocation7 [shape = 'u8[32768]{0}', space=vmem, size = 0x8000, scoped, tag = 'input window, operand 2, single buffered']
    #allocation8 [shape = 'u8[65536]{0}', space=vmem, size = 0x10000, scoped, tag = 'input window, operand 3, single buffered']
    #allocation9 [shape = 's32[1]{0}', space=sflag, size = 0x4, scoped, tag = 'scoped memory for tpu_custom_call.1']
    #allocation10 [shape = 'u8[32768]{0}', space=vmem, size = 0x8000, scoped, tag = 'input window, operand 4, single buffered']
    #allocation11 [shape = 'u8[16384]{0}', space=vmem, size = 0x4000, scoped, tag = 'output window, operand 0, single buffered']
    %11 = vsyncpa [#allocation3], 0
    %12 = vsyncpa [#allocation6], 0
    %13 = vsyncpa [#allocation9], 0
    %14 = vsyncpa [#allocation4], 0
    // Predicated region
    $region2: #{tpu_custom_call.1} parent=1 // pred_check
      _
    $region3: #{tpu_custom_call.1} parent=1 // pred_check_branch
      %16 = sbr.rel (0) target = $region5
    $region4: #{tpu_custom_call.1} parent=1 // pred_region
      %s18 = ssub.s32 256, 256
      %19 = vsyncadd [#allocation3], %s18
      %s20 = sshll.u32 [#allocation2], 4
      %s21 = int_to_ptr.vmem [resolvable:$true] %s20
      %26 = dma.hbm_to_vmem [thread:$0]  %s0, 256, %s21, [#allocation3], 64, 64, 4
    $region5: #{tpu_custom_call.1} parent=1 // pred_fallthru
      _
    // Predicated region
    $region6: #{tpu_custom_call.1} parent=1 // pred_check
      _
    $region7: #{tpu_custom_call.1} parent=1 // pred_check_branch
      %28 = sbr.rel (0) target = $region9
    $region8: #{tpu_custom_call.1} parent=1 // pred_region
      %s30 = ssub.s32 256, 256
      %31 = vsyncadd [#allocation6], %s30
      %s32 = sshll.u32 [#allocation5], 4
      %s33 = int_to_ptr.vmem [resolvable:$true] %s32
      %38 = dma.hbm_to_vmem [thread:$0]  %s1, 256, %s33, [#allocation6], 64, 64, 4
    $region9: #{tpu_custom_call.1} parent=1 // pred_fallthru
      _
    // Predicated region
    $region10: #{tpu_custom_call.1} parent=1 // pred_check
      _
    $region11: #{tpu_custom_call.1} parent=1 // pred_check_branch
      %40 = sbr.rel (0) target = $region13
    $region12: #{tpu_custom_call.1} parent=1 // pred_region
      %s42 = ssub.s32 1024, 1024
      %43 = vsyncadd [#allocation6], %s42
      %s44 = sshll.u32 [#allocation7], 4
      %s45 = int_to_ptr.vmem [resolvable:$true] %s44
      %50 = dma.hbm_to_vmem [thread:$0]  %s2, 1024, %s45, [#allocation6], 64, 64, 4
    $region13: #{tpu_custom_call.1} parent=1 // pred_fallthru
      _
    // Predicated region
    $region14: #{tpu_custom_call.1} parent=1 // pred_check
      _
    $region15: #{tpu_custom_call.1} parent=1 // pred_check_branch
      %52 = sbr.rel (0) target = $region17
    $region16: #{tpu_custom_call.1} parent=1 // pred_region
      %s54 = ssub.s32 2048, 2048
      %55 = vsyncadd [#allocation9], %s54
      %s56 = sshll.u32 [#allocation8], 4
      %s57 = int_to_ptr.vmem [resolvable:$true] %s56
      %62 = dma.hbm_to_vmem [thread:$0]  %s3, 2048, %s57, [#allocation9], 128, 128, 8
    $region17: #{tpu_custom_call.1} parent=1 // pred_fallthru
      _
    // Predicated region
    $region18: #{tpu_custom_call.1} parent=1 // pred_check
      _
    $region19: #{tpu_custom_call.1} parent=1 // pred_check_branch
      %64 = sbr.rel (0) target = $region21
    $region20: #{tpu_custom_call.1} parent=1 // pred_region
      %s66 = ssub.s32 1024, 1024
      %67 = vsyncadd [#allocation9], %s66
      %s68 = sshll.u32 [#allocation10], 4
      %s69 = int_to_ptr.vmem [resolvable:$true] %s68
      %74 = dma.hbm_to_vmem [thread:$0]  %s4, 1024, %s69, [#allocation9], 64, 64, 4
    $region21: #{tpu_custom_call.1} parent=1 // pred_fallthru
      _
    // Predicated region
    $region22: #{tpu_custom_call.1} parent=1 // pred_check
      _
    $region23: #{tpu_custom_call.1} parent=1 // pred_check_branch
      %76 = sbr.rel (0) target = $region25
    $region24: #{tpu_custom_call.1} parent=1 // pred_region
      _
    $region25: #{tpu_custom_call.1} parent=1 // pred_fallthru
      _
    // Predicated region
    $region26: #{tpu_custom_call.1} parent=1 // pred_check
      _
    $region27: #{tpu_custom_call.1} parent=1 // pred_check_branch
      %78 = sbr.rel (0) target = $region29
    $region28: #{tpu_custom_call.1} parent=1 // pred_region
      %79 = dma.done [#allocation3], 256
    $region29: #{tpu_custom_call.1} parent=1 // pred_fallthru
      _
    // Predicated region
    $region30: #{tpu_custom_call.1} parent=1 // pred_check
      _
    $region31: #{tpu_custom_call.1} parent=1 // pred_check_branch
      %81 = sbr.rel (0) target = $region33
    $region32: #{tpu_custom_call.1} parent=1 // pred_region
      %82 = dma.done [#allocation6], 256
    $region33: #{tpu_custom_call.1} parent=1 // pred_fallthru
      _
    // Predicated region
    $region34: #{tpu_custom_call.1} parent=1 // pred_check
      _
    $region35: #{tpu_custom_call.1} parent=1 // pred_check_branch
      %84 = sbr.rel (0) target = $region37
    $region36: #{tpu_custom_call.1} parent=1 // pred_region
      %85 = dma.done [#allocation6], 1024
    $region37: #{tpu_custom_call.1} parent=1 // pred_fallthru
      _
    // Predicated region
    $region38: #{tpu_custom_call.1} parent=1 // pred_check
      _
    $region39: #{tpu_custom_call.1} parent=1 // pred_check_branch
      %87 = sbr.rel (0) target = $region41
    $region40: #{tpu_custom_call.1} parent=1 // pred_region
      %88 = dma.done [#allocation9], 2048
    $region41: #{tpu_custom_call.1} parent=1 // pred_fallthru
      _
    // Predicated region
    $region42: #{tpu_custom_call.1} parent=1 // pred_check
      _
    $region43: #{tpu_custom_call.1} parent=1 // pred_check_branch
      %90 = sbr.rel (0) target = $region45
    $region44: #{tpu_custom_call.1} parent=1 // pred_region
      %91 = dma.done [#allocation9], 1024
    $region45: #{tpu_custom_call.1} parent=1 // pred_fallthru
      _
    %v93 = vld [vmem:[#allocation7] sm:$0xf]
    %v94 = vld [vmem:[#allocation7 + $0x4] sm:$0xf]
    %v95 = vld [vmem:[#allocation7 + $0x8] sm:$0xf]
    %v96 = vld [vmem:[#allocation7 + $0xc] sm:$0xf]
    %v97 = vld [vmem:[#allocation7 + $0x10] sm:$0xf]
    %v98 = vld [vmem:[#allocation7 + $0x14] sm:$0xf]
    %v99 = vld [vmem:[#allocation7 + $0x18] sm:$0xf]
    %v100 = vld [vmem:[#allocation7 + $0x1c] sm:$0xf]
    %v101 = vld [vmem:[#allocation7 + $0x20] sm:$0xf]
    %v102 = vld [vmem:[#allocation7 + $0x24] sm:$0xf]
    %v103 = vld [vmem:[#allocation7 + $0x28] sm:$0xf]
    %v104 = vld [vmem:[#allocation7 + $0x2c] sm:$0xf]
    %v105 = vld [vmem:[#allocation7 + $0x30] sm:$0xf]
    %v106 = vld [vmem:[#allocation7 + $0x34] sm:$0xf]
    %v107 = vld [vmem:[#allocation7 + $0x38] sm:$0xf]
    %v108 = vld [vmem:[#allocation7 + $0x3c] sm:$0xf]
    %v109 = vld [vmem:[#allocation8] sm:$0xff]
    %v110 = vld [vmem:[#allocation8 + $0x8] sm:$0xff]
    %v111 = vld [vmem:[#allocation8 + $0x10] sm:$0xff]
    %v112 = vld [vmem:[#allocation8 + $0x18] sm:$0xff]
    %v113 = vld [vmem:[#allocation8 + $0x20] sm:$0xff]
    %v114 = vld [vmem:[#allocation8 + $0x28] sm:$0xff]
    %v115 = vld [vmem:[#allocation8 + $0x30] sm:$0xff]
    %v116 = vld [vmem:[#allocation8 + $0x38] sm:$0xff]
    %v117 = vld [vmem:[#allocation8 + $0x40] sm:$0xff]
    %v118 = vld [vmem:[#allocation8 + $0x48] sm:$0xff]
    %v119 = vld [vmem:[#allocation8 + $0x50] sm:$0xff]
    %v120 = vld [vmem:[#allocation8 + $0x58] sm:$0xff]
    %v121 = vld [vmem:[#allocation8 + $0x60] sm:$0xff]
    %v122 = vld [vmem:[#allocation8 + $0x68] sm:$0xff]
    %v123 = vld [vmem:[#allocation8 + $0x70] sm:$0xff]
    %v124 = vld [vmem:[#allocation8 + $0x78] sm:$0xff]
    %v125 = vld [vmem:[#allocation10] sm:$0xf]
    %v126 = vld [vmem:[#allocation10 + $0x4] sm:$0xf]
    %v127 = vld [vmem:[#allocation10 + $0x8] sm:$0xf]
    %v128 = vld [vmem:[#allocation10 + $0xc] sm:$0xf]
    %v129 = vld [vmem:[#allocation10 + $0x10] sm:$0xf]
    %v130 = vld [vmem:[#allocation10 + $0x14] sm:$0xf]
    %v131 = vld [vmem:[#allocation10 + $0x18] sm:$0xf]
    %v132 = vld [vmem:[#allocation10 + $0x1c] sm:$0xf]
    %v133 = vld [vmem:[#allocation10 + $0x20] sm:$0xf]
    %v134 = vld [vmem:[#allocation10 + $0x24] sm:$0xf]
    %v135 = vld [vmem:[#allocation10 + $0x28] sm:$0xf]
    %v136 = vld [vmem:[#allocation10 + $0x2c] sm:$0xf]
    %v137 = vld [vmem:[#allocation10 + $0x30] sm:$0xf]
    %v138 = vld [vmem:[#allocation10 + $0x34] sm:$0xf]
    %v139 = vld [vmem:[#allocation10 + $0x38] sm:$0xf]
    %v140 = vld [vmem:[#allocation10 + $0x3c] sm:$0xf]
    %v141 = vld [vmem:[%s5] sm:$0x1]
    %v142 = vld [vmem:[#allocation2] sm:$0xf]
    %v143 = vld [vmem:[#allocation2 + $0x4] sm:$0xf]
    %v144 = vld [vmem:[#allocation2 + $0x8] sm:$0xf]
    %v145 = vld [vmem:[#allocation2 + $0xc] sm:$0xf]
    %v146 = vld [vmem:[#allocation5] sm:$0xf]
    %v147 = vld [vmem:[#allocation5 + $0x4] sm:$0xf]
    %v148 = vld [vmem:[#allocation5 + $0x8] sm:$0xf]
    %v149 = vld [vmem:[#allocation5 + $0xc] sm:$0xf]
    %v154 = vunpack.c.l.b16 %v142
    %v155 = vunpack.c.l.b16 %v143
    %v156 = vunpack.c.l.b16 %v144
    %v157 = vunpack.c.l.b16 %v145
    %v158 = vpack.c.b16 %v155, %v154
    %v159 = vpack.c.b16 %v157, %v156
    %v178 = vunpack.c.l.b16 %v93
    %v179 = vunpack.c.l.b16 %v94
    %v180 = vunpack.c.l.b16 %v95
    %v181 = vunpack.c.l.b16 %v96
    %v182 = vunpack.c.l.b16 %v97
    %v183 = vunpack.c.l.b16 %v98
    %v184 = vunpack.c.l.b16 %v99
    %v185 = vunpack.c.l.b16 %v100
    %v186 = vunpack.c.l.b16 %v101
    %v187 = vunpack.c.l.b16 %v102
    %v188 = vunpack.c.l.b16 %v103
    %v189 = vunpack.c.l.b16 %v104
    %v190 = vunpack.c.l.b16 %v105
    %v191 = vunpack.c.l.b16 %v106
    %v192 = vunpack.c.l.b16 %v107
    %v193 = vunpack.c.l.b16 %v108
    %v194 = vpack.c.b16 %v179, %v178
    %v195 = vpack.c.b16 %v181, %v180
    %v196 = vpack.c.b16 %v183, %v182
    %v197 = vpack.c.b16 %v185, %v184
    %v198 = vpack.c.b16 %v187, %v186
    %v199 = vpack.c.b16 %v189, %v188
    %v200 = vpack.c.b16 %v191, %v190
    %v201 = vpack.c.b16 %v193, %v192
    %210 = vmatprep.subr.bf16.mxu0 0
    %211 = vmatpush1.bf16.msra.mxu0 %v194
    %212 = vmatprep.subr.bf16.mxu0 0
    %213 = vmatpush1.bf16.msra.mxu0 %v195
    %214 = vmatprep.subr.bf16.mxu0 0
    %215 = vmatpush1.bf16.msra.mxu0 %v196
    %216 = vmatprep.subr.bf16.mxu0 0
    %217 = vmatpush1.bf16.msra.mxu0 %v197
    %218 = vmatprep.subr.bf16.mxu0 0
    %219 = vmatpush1.bf16.msra.mxu0 %v198
    %220 = vmatprep.subr.bf16.mxu0 0
    %221 = vmatpush1.bf16.msra.mxu0 %v199
    %222 = vmatprep.subr.bf16.mxu0 0
    %223 = vmatpush1.bf16.msra.mxu0 %v200
    %224 = vmatprep.subr.bf16.mxu0 0
    %225 = vmatpush1.bf16.msra.mxu0 %v201
    %226 = vmatprep.subr.bf16.mxu0 0
    %227 = vmatpush1.bf16.msra.mxu0 0
    %228 = vmatprep.subr.bf16.mxu0 0
    %229 = vmatpush1.bf16.msra.mxu0 0
    %230 = vmatprep.subr.bf16.mxu0 0
    %231 = vmatpush1.bf16.msra.mxu0 0
    %232 = vmatprep.subr.bf16.mxu0 0
    %233 = vmatpush1.bf16.msra.mxu0 0
    %234 = vmatprep.subr.bf16.mxu0 0
    %235 = vmatpush1.bf16.msra.mxu0 0
    %236 = vmatprep.subr.bf16.mxu0 0
    %237 = vmatpush1.bf16.msra.mxu0 0
    %238 = vmatprep.subr.bf16.mxu0 0
    %239 = vmatpush1.bf16.msra.mxu0 0
    %240 = vmatprep.subr.bf16.mxu0 0
    %241 = vmatpush1.bf16.msra.mxu0 0
    %242 = vmatprep.mubr.bf16.mxu0 0
    %243 = vmatmul.mubr.bf16.gmra.mrb[0].mxu0 %v158
    %v244 = vpop.f32.mrb[0].mxu0
    %v245 = vadd.f32 0.0, %v244
    %v246 = vpop.f32.mrb[0].mxu0
    %v247 = vpop.f32.mrb[0].mxu0
    %v248 = vadd.f32 0.0, %v247
    %v249 = vpop.f32.mrb[0].mxu0
    %250 = vmatprep.mubr.bf16.mxu0 0
    %251 = vmatmul.mubr.bf16.gmra.mrb[0].mxu0 %v159
    %v252 = vpop.f32.mrb[0].mxu0
    %v253 = vadd.f32 0.0, %v252
    %v254 = vpop.f32.mrb[0].mxu0
    %v255 = vpop.f32.mrb[0].mxu0
    %v256 = vadd.f32 0.0, %v255
    %v257 = vpop.f32.mrb[0].mxu0
    %258 = vdwg.mxu0
    %v259 = vmul.f32 %v245, 0.25
    %v260 = vmul.f32 %v248, 0.25
    %v261 = vmul.f32 %v253, 0.25
    %v262 = vmul.f32 %v256, 0.25
    %v267 = vunpack.c.l.b16 %v146
    %v268 = vunpack.c.l.b16 %v147
    %v269 = vunpack.c.l.b16 %v148
    %v270 = vunpack.c.l.b16 %v149
    %v271 = vpack.c.b16 %v268, %v267
    %v272 = vpack.c.b16 %v270, %v269
    %v291 = vunpack.c.l.b16 %v109
    %v292 = vunpack.c.h.b16 %v109
    %v293 = vunpack.c.l.b16 %v110
    %v294 = vunpack.c.h.b16 %v110
    %v295 = vunpack.c.l.b16 %v111
    %v296 = vunpack.c.h.b16 %v111
    %v297 = vunpack.c.l.b16 %v112
    %v298 = vunpack.c.h.b16 %v112
    %v299 = vunpack.c.l.b16 %v113
    %v300 = vunpack.c.h.b16 %v113
    %v301 = vunpack.c.l.b16 %v114
    %v302 = vunpack.c.h.b16 %v114
    %v303 = vunpack.c.l.b16 %v115
    %v304 = vunpack.c.h.b16 %v115
    %v305 = vunpack.c.l.b16 %v116
    %v306 = vunpack.c.h.b16 %v116
    %v307 = vunpack.c.l.b16 %v117
    %v308 = vunpack.c.h.b16 %v117
    %v309 = vunpack.c.l.b16 %v118
    %v310 = vunpack.c.h.b16 %v118
    %v311 = vunpack.c.l.b16 %v119
    %v312 = vunpack.c.h.b16 %v119
    %v313 = vunpack.c.l.b16 %v120
    %v314 = vunpack.c.h.b16 %v120
    %v315 = vunpack.c.l.b16 %v121
    %v316 = vunpack.c.h.b16 %v121
    %v317 = vunpack.c.l.b16 %v122
    %v318 = vunpack.c.h.b16 %v122
    %v319 = vunpack.c.l.b16 %v123
    %v320 = vunpack.c.h.b16 %v123
    %v321 = vunpack.c.l.b16 %v124
    %v322 = vunpack.c.h.b16 %v124
    %v323 = vpack.c.b16 %v293, %v291
    %v324 = vpack.c.b16 %v294, %v292
    %v325 = vpack.c.b16 %v297, %v295
    %v326 = vpack.c.b16 %v298, %v296
    %v327 = vpack.c.b16 %v301, %v299
    %v328 = vpack.c.b16 %v302, %v300
    %v329 = vpack.c.b16 %v305, %v303
    %v330 = vpack.c.b16 %v306, %v304
    %v331 = vpack.c.b16 %v309, %v307
    %v332 = vpack.c.b16 %v310, %v308
    %v333 = vpack.c.b16 %v313, %v311
    %v334 = vpack.c.b16 %v314, %v312
    %v335 = vpack.c.b16 %v317, %v315
    %v336 = vpack.c.b16 %v318, %v316
    %v337 = vpack.c.b16 %v321, %v319
    %v338 = vpack.c.b16 %v322, %v320
    %355 = vmatprep.subr.bf16.mxu0 %v324
    %356 = vmatpush1.bf16.msra.mxu0 %v323
    %357 = vmatprep.subr.bf16.mxu0 %v326
    %358 = vmatpush1.bf16.msra.mxu0 %v325
    %359 = vmatprep.subr.bf16.mxu0 %v328
    %360 = vmatpush1.bf16.msra.mxu0 %v327
    %361 = vmatprep.subr.bf16.mxu0 %v330
    %362 = vmatpush1.bf16.msra.mxu0 %v329
    %363 = vmatprep.subr.bf16.mxu0 %v332
    %364 = vmatpush1.bf16.msra.mxu0 %v331
    %365 = vmatprep.subr.bf16.mxu0 %v334
    %366 = vmatpush1.bf16.msra.mxu0 %v333
    %367 = vmatprep.subr.bf16.mxu0 %v336
    %368 = vmatpush1.bf16.msra.mxu0 %v335
    %369 = vmatprep.subr.bf16.mxu0 %v338
    %370 = vmatpush1.bf16.msra.mxu0 %v337
    %371 = vmatprep.subr.bf16.mxu0 0
    %372 = vmatpush1.bf16.msra.mxu0 0
    %373 = vmatprep.subr.bf16.mxu0 0
    %374 = vmatpush1.bf16.msra.mxu0 0
    %375 = vmatprep.subr.bf16.mxu0 0
    %376 = vmatpush1.bf16.msra.mxu0 0
    %377 = vmatprep.subr.bf16.mxu0 0
    %378 = vmatpush1.bf16.msra.mxu0 0
    %379 = vmatprep.subr.bf16.mxu0 0
    %380 = vmatpush1.bf16.msra.mxu0 0
    %381 = vmatprep.subr.bf16.mxu0 0
    %382 = vmatpush1.bf16.msra.mxu0 0
    %383 = vmatprep.subr.bf16.mxu0 0
    %384 = vmatpush1.bf16.msra.mxu0 0
    %385 = vmatprep.subr.bf16.mxu0 0
    %386 = vmatpush1.bf16.msra.mxu0 0
    %387 = vmatprep.mubr.bf16.mxu0 0
    %388 = vmatmul.mubr.bf16.gmra.mrb[0].mxu0 %v271
    %v389 = vpop.f32.mrb[0].mxu0
    %v390 = vadd.f32 0.0, %v389
    %v391 = vpop.f32.mrb[0].mxu0
    %v392 = vadd.f32 0.0, %v391
    %v393 = vpop.f32.mrb[0].mxu0
    %v394 = vadd.f32 0.0, %v393
    %v395 = vpop.f32.mrb[0].mxu0
    %v396 = vadd.f32 0.0, %v395
    %397 = vmatprep.mubr.bf16.mxu0 0
    %398 = vmatmul.mubr.bf16.gmra.mrb[0].mxu0 %v272
    %v399 = vpop.f32.mrb[0].mxu0
    %v400 = vadd.f32 0.0, %v399
    %v401 = vpop.f32.mrb[0].mxu0
    %v402 = vadd.f32 0.0, %v401
    %v403 = vpop.f32.mrb[0].mxu0
    %v404 = vadd.f32 0.0, %v403
    %v405 = vpop.f32.mrb[0].mxu0
    %v406 = vadd.f32 0.0, %v405
    %407 = vdwg.mxu0
    %v408 = vpack.c.bf16 %v260, %v259
    %v409 = vpack.c.bf16 %v262, %v261
    %v410 = vpack.c.bf16 %v394, %v390
    %v411 = vpack.c.bf16 %v396, %v392
    %v412 = vpack.c.bf16 %v404, %v400
    %v413 = vpack.c.bf16 %v406, %v402
    %vm414 = vcmask 130048
    %v416 = vsel %vm414, %v408, 0
    %v419 = vsel %vm414, %v410, 0
    %421 = vmatprep.subr.bf16.mxu0 0
    %422 = vmatpush1.bf16.xpose.msra.mxu0 %v419
    %423 = vmatprep.subr.bf16.mxu0 0
    %424 = vmatpush1.bf16.xpose.msra.mxu0 0
    %425 = vmatprep.subr.bf16.mxu0 0
    %426 = vmatpush1.bf16.xpose.msra.mxu0 0
    %427 = vmatprep.subr.bf16.mxu0 0
    %428 = vmatpush1.bf16.xpose.msra.mxu0 0
    %429 = vmatprep.subr.bf16.mxu0 0
    %430 = vmatpush1.bf16.xpose.msra.mxu0 0
    %431 = vmatprep.subr.bf16.mxu0 0
    %432 = vmatpush1.bf16.xpose.msra.mxu0 0
    %433 = vmatprep.subr.bf16.mxu0 0
    %434 = vmatpush1.bf16.xpose.msra.mxu0 0
    %435 = vmatprep.subr.bf16.mxu0 0
    %436 = vmatpush1.bf16.xpose.msra.mxu0 0
    %437 = vmatprep.subr.bf16.mxu0 0
    %438 = vmatpush1.bf16.xpose.msra.mxu0 0
    %439 = vmatprep.subr.bf16.mxu0 0
    %440 = vmatpush1.bf16.xpose.msra.mxu0 0
    %441 = vmatprep.subr.bf16.mxu0 0
    %442 = vmatpush1.bf16.xpose.msra.mxu0 0
    %443 = vmatprep.subr.bf16.mxu0 0
    %444 = vmatpush1.bf16.xpose.msra.mxu0 0
    %445 = vmatprep.subr.bf16.mxu0 0
    %446 = vmatpush1.bf16.xpose.msra.mxu0 0
    %447 = vmatprep.subr.bf16.mxu0 0
    %448 = vmatpush1.bf16.xpose.msra.mxu0 0
    %449 = vmatprep.subr.bf16.mxu0 0
    %450 = vmatpush1.bf16.xpose.msra.mxu0 0
    %451 = vmatprep.subr.bf16.mxu0 0
    %452 = vmatpush1.bf16.xpose.msra.mxu0 0
    %453 = vmatprep.mubr.bf16.mxu0 0
    %454 = vmatmul.mubr.bf16.gmra.mrb[0].mxu0 %v416
    %v455 = vpop.f32.mrb[0].mxu0
    %v456 = vadd.f32 0.0, %v455
    %v457 = vpop.f32.mrb[0].mxu0
    %v458 = vpop.f32.mrb[0].mxu0
    %v459 = vadd.f32 0.0, %v458
    %v460 = vpop.f32.mrb[0].mxu0
    %461 = vdwg.mxu0
    %v463 = vsel %vm414, %v409, 0
    %v466 = vsel %vm414, %v412, 0
    %468 = vmatprep.subr.bf16.mxu0 0
    %469 = vmatpush1.bf16.xpose.msra.mxu0 %v466
    %470 = vmatprep.subr.bf16.mxu0 0
    %471 = vmatpush1.bf16.xpose.msra.mxu0 0
    %472 = vmatprep.subr.bf16.mxu0 0
    %473 = vmatpush1.bf16.xpose.msra.mxu0 0
    %474 = vmatprep.subr.bf16.mxu0 0
    %475 = vmatpush1.bf16.xpose.msra.mxu0 0
    %476 = vmatprep.subr.bf16.mxu0 0
    %477 = vmatpush1.bf16.xpose.msra.mxu0 0
    %478 = vmatprep.subr.bf16.mxu0 0
    %479 = vmatpush1.bf16.xpose.msra.mxu0 0
    %480 = vmatprep.subr.bf16.mxu0 0
    %481 = vmatpush1.bf16.xpose.msra.mxu0 0
    %482 = vmatprep.subr.bf16.mxu0 0
    %483 = vmatpush1.bf16.xpose.msra.mxu0 0
    %484 = vmatprep.subr.bf16.mxu0 0
    %485 = vmatpush1.bf16.xpose.msra.mxu0 0
    %486 = vmatprep.subr.bf16.mxu0 0
    %487 = vmatpush1.bf16.xpose.msra.mxu0 0
    %488 = vmatprep.subr.bf16.mxu0 0
    %489 = vmatpush1.bf16.xpose.msra.mxu0 0
    %490 = vmatprep.subr.bf16.mxu0 0
    %491 = vmatpush1.bf16.xpose.msra.mxu0 0
    %492 = vmatprep.subr.bf16.mxu0 0
    %493 = vmatpush1.bf16.xpose.msra.mxu0 0
    %494 = vmatprep.subr.bf16.mxu0 0
    %495 = vmatpush1.bf16.xpose.msra.mxu0 0
    %496 = vmatprep.subr.bf16.mxu0 0
    %497 = vmatpush1.bf16.xpose.msra.mxu0 0
    %498 = vmatprep.subr.bf16.mxu0 0
    %499 = vmatpush1.bf16.xpose.msra.mxu0 0
    %500 = vmatprep.mubr.bf16.mxu0 0
    %501 = vmatmul.mubr.bf16.gmra.mrb[0].mxu0 %v463
    %v502 = vpop.f32.mrb[0].mxu0
    %v503 = vadd.f32 0.0, %v502
    %v504 = vpop.f32.mrb[0].mxu0
    %v505 = vpop.f32.mrb[0].mxu0
    %v506 = vadd.f32 0.0, %v505
    %v507 = vpop.f32.mrb[0].mxu0
    %508 = vdwg.mxu0
    %v509 = vsel %vm414, %v456, -inf
    %510 = vmax.xlane.f32.xlu0 %v509
    %v511 = vpop.xlane.xlu0 %510
    %v512 = vsel %vm414, %v459, -inf
    %513 = vmax.xlane.f32.xlu0 %v512
    %v514 = vpop.xlane.xlu0 %513
    %v515 = vsel %vm414, %v503, -inf
    %516 = vmax.xlane.f32.xlu0 %v515
    %v517 = vpop.xlane.xlu0 %516
    %v518 = vsel %vm414, %v506, -inf
    %519 = vmax.xlane.f32.xlu0 %v518
    %v520 = vpop.xlane.xlu0 %519
    %v521 = vsub.f32 %v456, %v511
    %v522 = vsub.f32 %v459, %v514
    %v523 = vsub.f32 %v503, %v517
    %v524 = vsub.f32 %v506, %v520
    %v525 = vmul.f32 %v521, 1.442695
    %v526 = vpow.pop %v525
    %v527 = vmul.f32 %v522, 1.442695
    %v528 = vpow.pop %v527
    %v529 = vmul.f32 %v523, 1.442695
    %v530 = vpow.pop %v529
    %v531 = vmul.f32 %v524, 1.442695
    %v532 = vpow.pop %v531
    %v533 = vsel %vm414, %v526, 0.0
    %534 = vadd.xlane.f32.xlu0 %v533
    %v535 = vpop.xlane.xlu0 %534
    %v536 = vsel %vm414, %v528, 0.0
    %537 = vadd.xlane.f32.xlu0 %v536
    %v538 = vpop.xlane.xlu0 %537
    %v539 = vsel %vm414, %v530, 0.0
    %540 = vadd.xlane.f32.xlu0 %v539
    %v541 = vpop.xlane.xlu0 %540
    %v542 = vsel %vm414, %v532, 0.0
    %543 = vadd.xlane.f32.xlu0 %v542
    %v544 = vpop.xlane.xlu0 %543
    %v545 = vrcp.pop %v535
    %v546 = vrcp.pop %v538
    %v547 = vrcp.pop %v541
    %v548 = vrcp.pop %v544
    %v549 = vmul.f32 %v526, %v545
    %v550 = vmul.f32 %v528, %v546
    %v551 = vmul.f32 %v530, %v547
    %v552 = vmul.f32 %v532, %v548
    %v553 = vpack.c.bf16 %v550, %v549
    %v554 = vpack.c.bf16 %v552, %v551
    %v556 = vsel %vm414, %v553, 0
    %558 = vmatprep.subr.bf16.mxu0 0
    %559 = vmatpush1.bf16.msra.mxu0 %v411
    %560 = vmatprep.subr.bf16.mxu0 0
    %561 = vmatpush1.bf16.msra.mxu0 0
    %562 = vmatprep.subr.bf16.mxu0 0
    %563 = vmatpush1.bf16.msra.mxu0 0
    %564 = vmatprep.subr.bf16.mxu0 0
    %565 = vmatpush1.bf16.msra.mxu0 0
    %566 = vmatprep.subr.bf16.mxu0 0
    %567 = vmatpush1.bf16.msra.mxu0 0
    %568 = vmatprep.subr.bf16.mxu0 0
    %569 = vmatpush1.bf16.msra.mxu0 0
    %570 = vmatprep.subr.bf16.mxu0 0
    %571 = vmatpush1.bf16.msra.mxu0 0
    %572 = vmatprep.subr.bf16.mxu0 0
    %573 = vmatpush1.bf16.msra.mxu0 0
    %574 = vmatprep.subr.bf16.mxu0 0
    %575 = vmatpush1.bf16.msra.mxu0 0
    %576 = vmatprep.subr.bf16.mxu0 0
    %577 = vmatpush1.bf16.msra.mxu0 0
    %578 = vmatprep.subr.bf16.mxu0 0
    %579 = vmatpush1.bf16.msra.mxu0 0
    %580 = vmatprep.subr.bf16.mxu0 0
    %581 = vmatpush1.bf16.msra.mxu0 0
    %582 = vmatprep.subr.bf16.mxu0 0
    %583 = vmatpush1.bf16.msra.mxu0 0
    %584 = vmatprep.subr.bf16.mxu0 0
    %585 = vmatpush1.bf16.msra.mxu0 0
    %586 = vmatprep.subr.bf16.mxu0 0
    %587 = vmatpush1.bf16.msra.mxu0 0
    %588 = vmatprep.subr.bf16.mxu0 0
    %589 = vmatpush1.bf16.msra.mxu0 0
    %590 = vmatprep.mubr.bf16.mxu0 0
    %591 = vmatmul.mubr.bf16.gmra.mrb[0].mxu0 %v556
    %v592 = vpop.f32.mrb[0].mxu0
    %v593 = vadd.f32 0.0, %v592
    %v594 = vpop.f32.mrb[0].mxu0
    %v595 = vpop.f32.mrb[0].mxu0
    %v596 = vadd.f32 0.0, %v595
    %v597 = vpop.f32.mrb[0].mxu0
    %598 = vdwg.mxu0
    %v600 = vsel %vm414, %v554, 0
    %602 = vmatprep.subr.bf16.mxu0 0
    %603 = vmatpush1.bf16.msra.mxu0 %v413
    %604 = vmatprep.subr.bf16.mxu0 0
    %605 = vmatpush1.bf16.msra.mxu0 0
    %606 = vmatprep.subr.bf16.mxu0 0
    %607 = vmatpush1.bf16.msra.mxu0 0
    %608 = vmatprep.subr.bf16.mxu0 0
    %609 = vmatpush1.bf16.msra.mxu0 0
    %610 = vmatprep.subr.bf16.mxu0 0
    %611 = vmatpush1.bf16.msra.mxu0 0
    %612 = vmatprep.subr.bf16.mxu0 0
    %613 = vmatpush1.bf16.msra.mxu0 0
    %614 = vmatprep.subr.bf16.mxu0 0
    %615 = vmatpush1.bf16.msra.mxu0 0
    %616 = vmatprep.subr.bf16.mxu0 0
    %617 = vmatpush1.bf16.msra.mxu0 0
    %618 = vmatprep.subr.bf16.mxu0 0
    %619 = vmatpush1.bf16.msra.mxu0 0
    %620 = vmatprep.subr.bf16.mxu0 0
    %621 = vmatpush1.bf16.msra.mxu0 0
    %622 = vmatprep.subr.bf16.mxu0 0
    %623 = vmatpush1.bf16.msra.mxu0 0
    %624 = vmatprep.subr.bf16.mxu0 0
    %625 = vmatpush1.bf16.msra.mxu0 0
    %626 = vmatprep.subr.bf16.mxu0 0
    %627 = vmatpush1.bf16.msra.mxu0 0
    %628 = vmatprep.subr.bf16.mxu0 0
    %629 = vmatpush1.bf16.msra.mxu0 0
    %630 = vmatprep.subr.bf16.mxu0 0
    %631 = vmatpush1.bf16.msra.mxu0 0
    %632 = vmatprep.subr.bf16.mxu0 0
    %633 = vmatpush1.bf16.msra.mxu0 0
    %634 = vmatprep.mubr.bf16.mxu0 0
    %635 = vmatmul.mubr.bf16.gmra.mrb[0].mxu0 %v600
    %v636 = vpop.f32.mrb[0].mxu0
    %v637 = vadd.f32 0.0, %v636
    %v638 = vpop.f32.mrb[0].mxu0
    %v639 = vpop.f32.mrb[0].mxu0
    %v640 = vadd.f32 0.0, %v639
    %v641 = vpop.f32.mrb[0].mxu0
    %642 = vdwg.mxu0
    %644 = vrot.lane.b32.xlu0 %v408, 112
    %v645 = vpop.permute.xlu0 %644
    %647 = vrot.lane.b32.xlu0 %v410, 112
    %v648 = vpop.permute.xlu0 %647
    %v650 = vsel %vm414, %v645, 0
    %v653 = vsel %vm414, %v648, 0
    %655 = vmatprep.subr.bf16.mxu0 0
    %656 = vmatpush1.bf16.xpose.msra.mxu0 %v653
    %657 = vmatprep.subr.bf16.mxu0 0
    %658 = vmatpush1.bf16.xpose.msra.mxu0 0
    %659 = vmatprep.subr.bf16.mxu0 0
    %660 = vmatpush1.bf16.xpose.msra.mxu0 0
    %661 = vmatprep.subr.bf16.mxu0 0
    %662 = vmatpush1.bf16.xpose.msra.mxu0 0
    %663 = vmatprep.subr.bf16.mxu0 0
    %664 = vmatpush1.bf16.xpose.msra.mxu0 0
    %665 = vmatprep.subr.bf16.mxu0 0
    %666 = vmatpush1.bf16.xpose.msra.mxu0 0
    %667 = vmatprep.subr.bf16.mxu0 0
    %668 = vmatpush1.bf16.xpose.msra.mxu0 0
    %669 = vmatprep.subr.bf16.mxu0 0
    %670 = vmatpush1.bf16.xpose.msra.mxu0 0
    %671 = vmatprep.subr.bf16.mxu0 0
    %672 = vmatpush1.bf16.xpose.msra.mxu0 0
    %673 = vmatprep.subr.bf16.mxu0 0
    %674 = vmatpush1.bf16.xpose.msra.mxu0 0
    %675 = vmatprep.subr.bf16.mxu0 0
    %676 = vmatpush1.bf16.xpose.msra.mxu0 0
    %677 = vmatprep.subr.bf16.mxu0 0
    %678 = vmatpush1.bf16.xpose.msra.mxu0 0
    %679 = vmatprep.subr.bf16.mxu0 0
    %680 = vmatpush1.bf16.xpose.msra.mxu0 0
    %681 = vmatprep.subr.bf16.mxu0 0
    %682 = vmatpush1.bf16.xpose.msra.mxu0 0
    %683 = vmatprep.subr.bf16.mxu0 0
    %684 = vmatpush1.bf16.xpose.msra.mxu0 0
    %685 = vmatprep.subr.bf16.mxu0 0
    %686 = vmatpush1.bf16.xpose.msra.mxu0 0
    %687 = vmatprep.mubr.bf16.mxu0 0
    %688 = vmatmul.mubr.bf16.gmra.mrb[0].mxu0 %v650
    %v689 = vpop.f32.mrb[0].mxu0
    %v690 = vadd.f32 0.0, %v689
    %v691 = vpop.f32.mrb[0].mxu0
    %v692 = vpop.f32.mrb[0].mxu0
    %v693 = vadd.f32 0.0, %v692
    %v694 = vpop.f32.mrb[0].mxu0
    %695 = vdwg.mxu0
    %697 = vrot.lane.b32.xlu0 %v409, 112
    %v698 = vpop.permute.xlu0 %697
    %700 = vrot.lane.b32.xlu0 %v412, 112
    %v701 = vpop.permute.xlu0 %700
    %v703 = vsel %vm414, %v698, 0
    %v706 = vsel %vm414, %v701, 0
    %708 = vmatprep.subr.bf16.mxu0 0
    %709 = vmatpush1.bf16.xpose.msra.mxu0 %v706
    %710 = vmatprep.subr.bf16.mxu0 0
    %711 = vmatpush1.bf16.xpose.msra.mxu0 0
    %712 = vmatprep.subr.bf16.mxu0 0
    %713 = vmatpush1.bf16.xpose.msra.mxu0 0
    %714 = vmatprep.subr.bf16.mxu0 0
    %715 = vmatpush1.bf16.xpose.msra.mxu0 0
    %716 = vmatprep.subr.bf16.mxu0 0
    %717 = vmatpush1.bf16.xpose.msra.mxu0 0
    %718 = vmatprep.subr.bf16.mxu0 0
    %719 = vmatpush1.bf16.xpose.msra.mxu0 0
    %720 = vmatprep.subr.bf16.mxu0 0
    %721 = vmatpush1.bf16.xpose.msra.mxu0 0
    %722 = vmatprep.subr.bf16.mxu0 0
    %723 = vmatpush1.bf16.xpose.msra.mxu0 0
    %724 = vmatprep.subr.bf16.mxu0 0
    %725 = vmatpush1.bf16.xpose.msra.mxu0 0
    %726 = vmatprep.subr.bf16.mxu0 0
    %727 = vmatpush1.bf16.xpose.msra.mxu0 0
    %728 = vmatprep.subr.bf16.mxu0 0
    %729 = vmatpush1.bf16.xpose.msra.mxu0 0
    %730 = vmatprep.subr.bf16.mxu0 0
    %731 = vmatpush1.bf16.xpose.msra.mxu0 0
    %732 = vmatprep.subr.bf16.mxu0 0
    %733 = vmatpush1.bf16.xpose.msra.mxu0 0
    %734 = vmatprep.subr.bf16.mxu0 0
    %735 = vmatpush1.bf16.xpose.msra.mxu0 0
    %736 = vmatprep.subr.bf16.mxu0 0
    %737 = vmatpush1.bf16.xpose.msra.mxu0 0
    %738 = vmatprep.subr.bf16.mxu0 0
    %739 = vmatpush1.bf16.xpose.msra.mxu0 0
    %740 = vmatprep.mubr.bf16.mxu0 0
    %741 = vmatmul.mubr.bf16.gmra.mrb[0].mxu0 %v703
    %v742 = vpop.f32.mrb[0].mxu0
    %v743 = vadd.f32 0.0, %v742
    %v744 = vpop.f32.mrb[0].mxu0
    %v745 = vpop.f32.mrb[0].mxu0
    %v746 = vadd.f32 0.0, %v745
    %v747 = vpop.f32.mrb[0].mxu0
    %748 = vdwg.mxu0
    %v749 = vsel %vm414, %v690, -inf
    %750 = vmax.xlane.f32.xlu0 %v749
    %v751 = vpop.xlane.xlu0 %750
    %v752 = vsel %vm414, %v693, -inf
    %753 = vmax.xlane.f32.xlu0 %v752
    %v754 = vpop.xlane.xlu0 %753
    %v755 = vsel %vm414, %v743, -inf
    %756 = vmax.xlane.f32.xlu0 %v755
    %v757 = vpop.xlane.xlu0 %756
    %v758 = vsel %vm414, %v746, -inf
    %759 = vmax.xlane.f32.xlu0 %v758
    %v760 = vpop.xlane.xlu0 %759
    %v761 = vsub.f32 %v690, %v751
    %v762 = vsub.f32 %v693, %v754
    %v763 = vsub.f32 %v743, %v757
    %v764 = vsub.f32 %v746, %v760
    %v765 = vmul.f32 %v761, 1.442695
    %v766 = vpow.pop %v765
    %v767 = vmul.f32 %v762, 1.442695
    %v768 = vpow.pop %v767
    %v769 = vmul.f32 %v763, 1.442695
    %v770 = vpow.pop %v769
    %v771 = vmul.f32 %v764, 1.442695
    %v772 = vpow.pop %v771
    %v773 = vsel %vm414, %v766, 0.0
    %774 = vadd.xlane.f32.xlu0 %v773
    %v775 = vpop.xlane.xlu0 %774
    %v776 = vsel %vm414, %v768, 0.0
    %777 = vadd.xlane.f32.xlu0 %v776
    %v778 = vpop.xlane.xlu0 %777
    %v779 = vsel %vm414, %v770, 0.0
    %780 = vadd.xlane.f32.xlu0 %v779
    %v781 = vpop.xlane.xlu0 %780
    %v782 = vsel %vm414, %v772, 0.0
    %783 = vadd.xlane.f32.xlu0 %v782
    %v784 = vpop.xlane.xlu0 %783
    %v785 = vrcp.pop %v775
    %v786 = vrcp.pop %v778
    %v787 = vrcp.pop %v781
    %v788 = vrcp.pop %v784
    %v789 = vmul.f32 %v766, %v785
    %v790 = vmul.f32 %v768, %v786
    %v791 = vmul.f32 %v770, %v787
    %v792 = vmul.f32 %v772, %v788
    %v793 = vpack.c.bf16 %v790, %v789
    %v794 = vpack.c.bf16 %v792, %v791
    %796 = vrot.lane.b32.xlu0 %v411, 112
    %v797 = vpop.permute.xlu0 %796
    %v800 = vsel %vm414, %v793, 0
    %802 = vmatprep.subr.bf16.mxu0 0
    %803 = vmatpush1.bf16.msra.mxu0 %v797
    %804 = vmatprep.subr.bf16.mxu0 0
    %805 = vmatpush1.bf16.msra.mxu0 0
    %806 = vmatprep.subr.bf16.mxu0 0
    %807 = vmatpush1.bf16.msra.mxu0 0
    %808 = vmatprep.subr.bf16.mxu0 0
    %809 = vmatpush1.bf16.msra.mxu0 0
    %810 = vmatprep.subr.bf16.mxu0 0
    %811 = vmatpush1.bf16.msra.mxu0 0
    %812 = vmatprep.subr.bf16.mxu0 0
    %813 = vmatpush1.bf16.msra.mxu0 0
    %814 = vmatprep.subr.bf16.mxu0 0
    %815 = vmatpush1.bf16.msra.mxu0 0
    %816 = vmatprep.subr.bf16.mxu0 0
    %817 = vmatpush1.bf16.msra.mxu0 0
    %818 = vmatprep.subr.bf16.mxu0 0
    %819 = vmatpush1.bf16.msra.mxu0 0
    %820 = vmatprep.subr.bf16.mxu0 0
    %821 = vmatpush1.bf16.msra.mxu0 0
    %822 = vmatprep.subr.bf16.mxu0 0
    %823 = vmatpush1.bf16.msra.mxu0 0
    %824 = vmatprep.subr.bf16.mxu0 0
    %825 = vmatpush1.bf16.msra.mxu0 0
    %826 = vmatprep.subr.bf16.mxu0 0
    %827 = vmatpush1.bf16.msra.mxu0 0
    %828 = vmatprep.subr.bf16.mxu0 0
    %829 = vmatpush1.bf16.msra.mxu0 0
    %830 = vmatprep.subr.bf16.mxu0 0
    %831 = vmatpush1.bf16.msra.mxu0 0
    %832 = vmatprep.subr.bf16.mxu0 0
    %833 = vmatpush1.bf16.msra.mxu0 0
    %834 = vmatprep.mubr.bf16.mxu0 0
    %835 = vmatmul.mubr.bf16.gmra.mrb[0].mxu0 %v800
    %v836 = vpop.f32.mrb[0].mxu0
    %v837 = vadd.f32 0.0, %v836
    %v838 = vpop.f32.mrb[0].mxu0
    %v839 = vpop.f32.mrb[0].mxu0
    %v840 = vadd.f32 0.0, %v839
    %v841 = vpop.f32.mrb[0].mxu0
    %842 = vdwg.mxu0
    %844 = vrot.lane.b32.xlu0 %v413, 112
    %v845 = vpop.permute.xlu0 %844
    %v848 = vsel %vm414, %v794, 0
    %850 = vmatprep.subr.bf16.mxu0 0
    %851 = vmatpush1.bf16.msra.mxu0 %v845
    %852 = vmatprep.subr.bf16.mxu0 0
    %853 = vmatpush1.bf16.msra.mxu0 0
    %854 = vmatprep.subr.bf16.mxu0 0
    %855 = vmatpush1.bf16.msra.mxu0 0
    %856 = vmatprep.subr.bf16.mxu0 0
    %857 = vmatpush1.bf16.msra.mxu0 0
    %858 = vmatprep.subr.bf16.mxu0 0
    %859 = vmatpush1.bf16.msra.mxu0 0
    %860 = vmatprep.subr.bf16.mxu0 0
    %861 = vmatpush1.bf16.msra.mxu0 0
    %862 = vmatprep.subr.bf16.mxu0 0
    %863 = vmatpush1.bf16.msra.mxu0 0
    %864 = vmatprep.subr.bf16.mxu0 0
    %865 = vmatpush1.bf16.msra.mxu0 0
    %866 = vmatprep.subr.bf16.mxu0 0
    %867 = vmatpush1.bf16.msra.mxu0 0
    %868 = vmatprep.subr.bf16.mxu0 0
    %869 = vmatpush1.bf16.msra.mxu0 0
    %870 = vmatprep.subr.bf16.mxu0 0
    %871 = vmatpush1.bf16.msra.mxu0 0
    %872 = vmatprep.subr.bf16.mxu0 0
    %873 = vmatpush1.bf16.msra.mxu0 0
    %874 = vmatprep.subr.bf16.mxu0 0
    %875 = vmatpush1.bf16.msra.mxu0 0
    %876 = vmatprep.subr.bf16.mxu0 0
    %877 = vmatpush1.bf16.msra.mxu0 0
    %878 = vmatprep.subr.bf16.mxu0 0
    %879 = vmatpush1.bf16.msra.mxu0 0
    %880 = vmatprep.subr.bf16.mxu0 0
    %881 = vmatpush1.bf16.msra.mxu0 0
    %882 = vmatprep.mubr.bf16.mxu0 0
    %883 = vmatmul.mubr.bf16.gmra.mrb[0].mxu0 %v848
    %v884 = vpop.f32.mrb[0].mxu0
    %v885 = vadd.f32 0.0, %v884
    %v886 = vpop.f32.mrb[0].mxu0
    %v887 = vpop.f32.mrb[0].mxu0
    %v888 = vadd.f32 0.0, %v887
    %v889 = vpop.f32.mrb[0].mxu0
    %890 = vdwg.mxu0
    %891 = vrot.lane.b32.xlu0 %v408, 96
    %v892 = vpop.permute.xlu0 %891
    %893 = vrot.lane.b32.xlu0 %v410, 96
    %v894 = vpop.permute.xlu0 %893
    %v896 = vsel %vm414, %v892, 0
    %v899 = vsel %vm414, %v894, 0
    %901 = vmatprep.subr.bf16.mxu0 0
    %902 = vmatpush1.bf16.xpose.msra.mxu0 %v899
    %903 = vmatprep.subr.bf16.mxu0 0
    %904 = vmatpush1.bf16.xpose.msra.mxu0 0
    %905 = vmatprep.subr.bf16.mxu0 0
    %906 = vmatpush1.bf16.xpose.msra.mxu0 0
    %907 = vmatprep.subr.bf16.mxu0 0
    %908 = vmatpush1.bf16.xpose.msra.mxu0 0
    %909 = vmatprep.subr.bf16.mxu0 0
    %910 = vmatpush1.bf16.xpose.msra.mxu0 0
    %911 = vmatprep.subr.bf16.mxu0 0
    %912 = vmatpush1.bf16.xpose.msra.mxu0 0
    %913 = vmatprep.subr.bf16.mxu0 0
    %914 = vmatpush1.bf16.xpose.msra.mxu0 0
    %915 = vmatprep.subr.bf16.mxu0 0
    %916 = vmatpush1.bf16.xpose.msra.mxu0 0
    %917 = vmatprep.subr.bf16.mxu0 0
    %918 = vmatpush1.bf16.xpose.msra.mxu0 0
    %919 = vmatprep.subr.bf16.mxu0 0
    %920 = vmatpush1.bf16.xpose.msra.mxu0 0
    %921 = vmatprep.subr.bf16.mxu0 0
    %922 = vmatpush1.bf16.xpose.msra.mxu0 0
    %923 = vmatprep.subr.bf16.mxu0 0
    %924 = vmatpush1.bf16.xpose.msra.mxu0 0
    %925 = vmatprep.subr.bf16.mxu0 0
    %926 = vmatpush1.bf16.xpose.msra.mxu0 0
    %927 = vmatprep.subr.bf16.mxu0 0
    %928 = vmatpush1.bf16.xpose.msra.mxu0 0
    %929 = vmatprep.subr.bf16.mxu0 0
    %930 = vmatpush1.bf16.xpose.msra.mxu0 0
    %931 = vmatprep.subr.bf16.mxu0 0
    %932 = vmatpush1.bf16.xpose.msra.mxu0 0
    %933 = vmatprep.mubr.bf16.mxu0 0
    %934 = vmatmul.mubr.bf16.gmra.mrb[0].mxu0 %v896
    %v935 = vpop.f32.mrb[0].mxu0
    %v936 = vadd.f32 0.0, %v935
    %v937 = vpop.f32.mrb[0].mxu0
    %v938 = vpop.f32.mrb[0].mxu0
    %v939 = vadd.f32 0.0, %v938
    %v940 = vpop.f32.mrb[0].mxu0
    %941 = vdwg.mxu0
    %942 = vrot.lane.b32.xlu0 %v409, 96
    %v943 = vpop.permute.xlu0 %942
    %944 = vrot.lane.b32.xlu0 %v412, 96
    %v945 = vpop.permute.xlu0 %944
    %v947 = vsel %vm414, %v943, 0
    %v950 = vsel %vm414, %v945, 0
    %952 = vmatprep.subr.bf16.mxu0 0
    %953 = vmatpush1.bf16.xpose.msra.mxu0 %v950
    %954 = vmatprep.subr.bf16.mxu0 0
    %955 = vmatpush1.bf16.xpose.msra.mxu0 0
    %956 = vmatprep.subr.bf16.mxu0 0
    %957 = vmatpush1.bf16.xpose.msra.mxu0 0
    %958 = vmatprep.subr.bf16.mxu0 0
    %959 = vmatpush1.bf16.xpose.msra.mxu0 0
    %960 = vmatprep.subr.bf16.mxu0 0
    %961 = vmatpush1.bf16.xpose.msra.mxu0 0
    %962 = vmatprep.subr.bf16.mxu0 0
    %963 = vmatpush1.bf16.xpose.msra.mxu0 0
    %964 = vmatprep.subr.bf16.mxu0 0
    %965 = vmatpush1.bf16.xpose.msra.mxu0 0
    %966 = vmatprep.subr.bf16.mxu0 0
    %967 = vmatpush1.bf16.xpose.msra.mxu0 0
    %968 = vmatprep.subr.bf16.mxu0 0
    %969 = vmatpush1.bf16.xpose.msra.mxu0 0
    %970 = vmatprep.subr.bf16.mxu0 0
    %971 = vmatpush1.bf16.xpose.msra.mxu0 0
    %972 = vmatprep.subr.bf16.mxu0 0
    %973 = vmatpush1.bf16.xpose.msra.mxu0 0
    %974 = vmatprep.subr.bf16.mxu0 0
    %975 = vmatpush1.bf16.xpose.msra.mxu0 0
    %976 = vmatprep.subr.bf16.mxu0 0
    %977 = vmatpush1.bf16.xpose.msra.mxu0 0
    %978 = vmatprep.subr.bf16.mxu0 0
    %979 = vmatpush1.bf16.xpose.msra.mxu0 0
    %980 = vmatprep.subr.bf16.mxu0 0
    %981 = vmatpush1.bf16.xpose.msra.mxu0 0
    %982 = vmatprep.subr.bf16.mxu0 0
    %983 = vmatpush1.bf16.xpose.msra.mxu0 0
    %984 = vmatprep.mubr.bf16.mxu0 0
    %985 = vmatmul.mubr.bf16.gmra.mrb[0].mxu0 %v947
    %v986 = vpop.f32.mrb[0].mxu0
    %v987 = vadd.f32 0.0, %v986
    %v988 = vpop.f32.mrb[0].mxu0
    %v989 = vpop.f32.mrb[0].mxu0
    %v990 = vadd.f32 0.0, %v989
    %v991 = vpop.f32.mrb[0].mxu0
    %992 = vdwg.mxu0
    %v993 = vsel %vm414, %v936, -inf
    %994 = vmax.xlane.f32.xlu0 %v993
    %v995 = vpop.xlane.xlu0 %994
    %v996 = vsel %vm414, %v939, -inf
    %997 = vmax.xlane.f32.xlu0 %v996
    %v998 = vpop.xlane.xlu0 %997
    %v999 = vsel %vm414, %v987, -inf
    %1000 = vmax.xlane.f32.xlu0 %v999
    %v1001 = vpop.xlane.xlu0 %1000
    %v1002 = vsel %vm414, %v990, -inf
    %1003 = vmax.xlane.f32.xlu0 %v1002
    %v1004 = vpop.xlane.xlu0 %1003
    %v1005 = vsub.f32 %v936, %v995
    %v1006 = vsub.f32 %v939, %v998
    %v1007 = vsub.f32 %v987, %v1001
    %v1008 = vsub.f32 %v990, %v1004
    %v1009 = vmul.f32 %v1005, 1.442695
    %v1010 = vpow.pop %v1009
    %v1011 = vmul.f32 %v1006, 1.442695
    %v1012 = vpow.pop %v1011
    %v1013 = vmul.f32 %v1007, 1.442695
    %v1014 = vpow.pop %v1013
    %v1015 = vmul.f32 %v1008, 1.442695
    %v1016 = vpow.pop %v1015
    %v1017 = vsel %vm414, %v1010, 0.0
    %1018 = vadd.xlane.f32.xlu0 %v1017
    %v1019 = vpop.xlane.xlu0 %1018
    %v1020 = vsel %vm414, %v1012, 0.0
    %1021 = vadd.xlane.f32.xlu0 %v1020
    %v1022 = vpop.xlane.xlu0 %1021
    %v1023 = vsel %vm414, %v1014, 0.0
    %1024 = vadd.xlane.f32.xlu0 %v1023
    %v1025 = vpop.xlane.xlu0 %1024
    %v1026 = vsel %vm414, %v1016, 0.0
    %1027 = vadd.xlane.f32.xlu0 %v1026
    %v1028 = vpop.xlane.xlu0 %1027
    %v1029 = vrcp.pop %v1019
    %v1030 = vrcp.pop %v1022
    %v1031 = vrcp.pop %v1025
    %v1032 = vrcp.pop %v1028
    %v1033 = vmul.f32 %v1010, %v1029
    %v1034 = vmul.f32 %v1012, %v1030
    %v1035 = vmul.f32 %v1014, %v1031
    %v1036 = vmul.f32 %v1016, %v1032
    %v1037 = vpack.c.bf16 %v1034, %v1033
    %v1038 = vpack.c.bf16 %v1036, %v1035
    %1039 = vrot.lane.b32.xlu0 %v411, 96
    %v1040 = vpop.permute.xlu0 %1039
    %v1043 = vsel %vm414, %v1037, 0
    %1045 = vmatprep.subr.bf16.mxu0 0
    %1046 = vmatpush1.bf16.msra.mxu0 %v1040
    %1047 = vmatprep.subr.bf16.mxu0 0
    %1048 = vmatpush1.bf16.msra.mxu0 0
    %1049 = vmatprep.subr.bf16.mxu0 0
    %1050 = vmatpush1.bf16.msra.mxu0 0
    %1051 = vmatprep.subr.bf16.mxu0 0
    %1052 = vmatpush1.bf16.msra.mxu0 0
    %1053 = vmatprep.subr.bf16.mxu0 0
    %1054 = vmatpush1.bf16.msra.mxu0 0
    %1055 = vmatprep.subr.bf16.mxu0 0
    %1056 = vmatpush1.bf16.msra.mxu0 0
    %1057 = vmatprep.subr.bf16.mxu0 0
    %1058 = vmatpush1.bf16.msra.mxu0 0
    %1059 = vmatprep.subr.bf16.mxu0 0
    %1060 = vmatpush1.bf16.msra.mxu0 0
    %1061 = vmatprep.subr.bf16.mxu0 0
    %1062 = vmatpush1.bf16.msra.mxu0 0
    %1063 = vmatprep.subr.bf16.mxu0 0
    %1064 = vmatpush1.bf16.msra.mxu0 0
    %1065 = vmatprep.subr.bf16.mxu0 0
    %1066 = vmatpush1.bf16.msra.mxu0 0
    %1067 = vmatprep.subr.bf16.mxu0 0
    %1068 = vmatpush1.bf16.msra.mxu0 0
    %1069 = vmatprep.subr.bf16.mxu0 0
    %1070 = vmatpush1.bf16.msra.mxu0 0
    %1071 = vmatprep.subr.bf16.mxu0 0
    %1072 = vmatpush1.bf16.msra.mxu0 0
    %1073 = vmatprep.subr.bf16.mxu0 0
    %1074 = vmatpush1.bf16.msra.mxu0 0
    %1075 = vmatprep.subr.bf16.mxu0 0
    %1076 = vmatpush1.bf16.msra.mxu0 0
    %1077 = vmatprep.mubr.bf16.mxu0 0
    %1078 = vmatmul.mubr.bf16.gmra.mrb[0].mxu0 %v1043
    %v1079 = vpop.f32.mrb[0].mxu0
    %v1080 = vadd.f32 0.0, %v1079
    %v1081 = vpop.f32.mrb[0].mxu0
    %v1082 = vpop.f32.mrb[0].mxu0
    %v1083 = vadd.f32 0.0, %v1082
    %v1084 = vpop.f32.mrb[0].mxu0
    %1085 = vdwg.mxu0
    %1086 = vrot.lane.b32.xlu0 %v413, 96
    %v1087 = vpop.permute.xlu0 %1086
    %v1090 = vsel %vm414, %v1038, 0
    %1092 = vmatprep.subr.bf16.mxu0 0
    %1093 = vmatpush1.bf16.msra.mxu0 %v1087
    %1094 = vmatprep.subr.bf16.mxu0 0
    %1095 = vmatpush1.bf16.msra.mxu0 0
    %1096 = vmatprep.subr.bf16.mxu0 0
    %1097 = vmatpush1.bf16.msra.mxu0 0
    %1098 = vmatprep.subr.bf16.mxu0 0
    %1099 = vmatpush1.bf16.msra.mxu0 0
    %1100 = vmatprep.subr.bf16.mxu0 0
    %1101 = vmatpush1.bf16.msra.mxu0 0
    %1102 = vmatprep.subr.bf16.mxu0 0
    %1103 = vmatpush1.bf16.msra.mxu0 0
    %1104 = vmatprep.subr.bf16.mxu0 0
    %1105 = vmatpush1.bf16.msra.mxu0 0
    %1106 = vmatprep.subr.bf16.mxu0 0
    %1107 = vmatpush1.bf16.msra.mxu0 0
    %1108 = vmatprep.subr.bf16.mxu0 0
    %1109 = vmatpush1.bf16.msra.mxu0 0
    %1110 = vmatprep.subr.bf16.mxu0 0
    %1111 = vmatpush1.bf16.msra.mxu0 0
    %1112 = vmatprep.subr.bf16.mxu0 0
    %1113 = vmatpush1.bf16.msra.mxu0 0
    %1114 = vmatprep.subr.bf16.mxu0 0
    %1115 = vmatpush1.bf16.msra.mxu0 0
    %1116 = vmatprep.subr.bf16.mxu0 0
    %1117 = vmatpush1.bf16.msra.mxu0 0
    %1118 = vmatprep.subr.bf16.mxu0 0
    %1119 = vmatpush1.bf16.msra.mxu0 0
    %1120 = vmatprep.subr.bf16.mxu0 0
    %1121 = vmatpush1.bf16.msra.mxu0 0
    %1122 = vmatprep.subr.bf16.mxu0 0
    %1123 = vmatpush1.bf16.msra.mxu0 0
    %1124 = vmatprep.mubr.bf16.mxu0 0
    %1125 = vmatmul.mubr.bf16.gmra.mrb[0].mxu0 %v1090
    %v1126 = vpop.f32.mrb[0].mxu0
    %v1127 = vadd.f32 0.0, %v1126
    %v1128 = vpop.f32.mrb[0].mxu0
    %v1129 = vpop.f32.mrb[0].mxu0
    %v1130 = vadd.f32 0.0, %v1129
    %v1131 = vpop.f32.mrb[0].mxu0
    %1132 = vdwg.mxu0
    %1133 = vrot.lane.b32.xlu0 %v408, 80
    %v1134 = vpop.permute.xlu0 %1133
    %1135 = vrot.lane.b32.xlu0 %v410, 80
    %v1136 = vpop.permute.xlu0 %1135
    %v1138 = vsel %vm414, %v1134, 0
    %v1141 = vsel %vm414, %v1136, 0
    %1143 = vmatprep.subr.bf16.mxu0 0
    %1144 = vmatpush1.bf16.xpose.msra.mxu0 %v1141
    %1145 = vmatprep.subr.bf16.mxu0 0
    %1146 = vmatpush1.bf16.xpose.msra.mxu0 0
    %1147 = vmatprep.subr.bf16.mxu0 0
    %1148 = vmatpush1.bf16.xpose.msra.mxu0 0
    %1149 = vmatprep.subr.bf16.mxu0 0
    %1150 = vmatpush1.bf16.xpose.msra.mxu0 0
    %1151 = vmatprep.subr.bf16.mxu0 0
    %1152 = vmatpush1.bf16.xpose.msra.mxu0 0
    %1153 = vmatprep.subr.bf16.mxu0 0
    %1154 = vmatpush1.bf16.xpose.msra.mxu0 0
    %1155 = vmatprep.subr.bf16.mxu0 0
    %1156 = vmatpush1.bf16.xpose.msra.mxu0 0
    %1157 = vmatprep.subr.bf16.mxu0 0
    %1158 = vmatpush1.bf16.xpose.msra.mxu0 0
    %1159 = vmatprep.subr.bf16.mxu0 0
    %1160 = vmatpush1.bf16.xpose.msra.mxu0 0
    %1161 = vmatprep.subr.bf16.mxu0 0
    %1162 = vmatpush1.bf16.xpose.msra.mxu0 0
    %1163 = vmatprep.subr.bf16.mxu0 0
    %1164 = vmatpush1.bf16.xpose.msra.mxu0 0
    %1165 = vmatprep.subr.bf16.mxu0 0
    %1166 = vmatpush1.bf16.xpose.msra.mxu0 0
    %1167 = vmatprep.subr.bf16.mxu0 0
    %1168 = vmatpush1.bf16.xpose.msra.mxu0 0
    %1169 = vmatprep.subr.bf16.mxu0 0
    %1170 = vmatpush1.bf16.xpose.msra.mxu0 0
    %1171 = vmatprep.subr.bf16.mxu0 0
    %1172 = vmatpush1.bf16.xpose.msra.mxu0 0
    %1173 = vmatprep.subr.bf16.mxu0 0
    %1174 = vmatpush1.bf16.xpose.msra.mxu0 0
    %1175 = vmatprep.mubr.bf16.mxu0 0
    %1176 = vmatmul.mubr.bf16.gmra.mrb[0].mxu0 %v1138
    %v1177 = vpop.f32.mrb[0].mxu0
    %v1178 = vadd.f32 0.0, %v1177
    %v1179 = vpop.f32.mrb[0].mxu0
    %v1180 = vpop.f32.mrb[0].mxu0
    %v1181 = vadd.f32 0.0, %v1180
    %v1182 = vpop.f32.mrb[0].mxu0
    %1183 = vdwg.mxu0
    %1184 = vrot.lane.b32.xlu0 %v409, 80
    %v1185 = vpop.permute.xlu0 %1184
    %1186 = vrot.lane.b32.xlu0 %v412, 80
    %v1187 = vpop.permute.xlu0 %1186
    %v1189 = vsel %vm414, %v1185, 0
    %v1192 = vsel %vm414, %v1187, 0
    %1194 = vmatprep.subr.bf16.mxu0 0
    %1195 = vmatpush1.bf16.xpose.msra.mxu0 %v1192
    %1196 = vmatprep.subr.bf16.mxu0 0
    %1197 = vmatpush1.bf16.xpose.msra.mxu0 0
    %1198 = vmatprep.subr.bf16.mxu0 0
    %1199 = vmatpush1.bf16.xpose.msra.mxu0 0
    %1200 = vmatprep.subr.bf16.mxu0 0
    %1201 = vmatpush1.bf16.xpose.msra.mxu0 0
    %1202 = vmatprep.subr.bf16.mxu0 0
    %1203 = vmatpush1.bf16.xpose.msra.mxu0 0
    %1204 = vmatprep.subr.bf16.mxu0 0
    %1205 = vmatpush1.bf16.xpose.msra.mxu0 0
    %1206 = vmatprep.subr.bf16.mxu0 0
    %1207 = vmatpush1.bf16.xpose.msra.mxu0 0
    %1208 = vmatprep.subr.bf16.mxu0 0
    %1209 = vmatpush1.bf16.xpose.msra.mxu0 0
    %1210 = vmatprep.subr.bf16.mxu0 0
    %1211 = vmatpush1.bf16.xpose.msra.mxu0 0
    %1212 = vmatprep.subr.bf16.mxu0 0
    %1213 = vmatpush1.bf16.xpose.msra.mxu0 0
    %1214 = vmatprep.subr.bf16.mxu0 0
    %1215 = vmatpush1.bf16.xpose.msra.mxu0 0
    %1216 = vmatprep.subr.bf16.mxu0 0
    %1217 = vmatpush1.bf16.xpose.msra.mxu0 0
    %1218 = vmatprep.subr.bf16.mxu0 0
    %1219 = vmatpush1.bf16.xpose.msra.mxu0 0
    %1220 = vmatprep.subr.bf16.mxu0 0
    %1221 = vmatpush1.bf16.xpose.msra.mxu0 0
    %1222 = vmatprep.subr.bf16.mxu0 0
    %1223 = vmatpush1.bf16.xpose.msra.mxu0 0
    %1224 = vmatprep.subr.bf16.mxu0 0
    %1225 = vmatpush1.bf16.xpose.msra.mxu0 0
    %1226 = vmatprep.mubr.bf16.mxu0 0
    %1227 = vmatmul.mubr.bf16.gmra.mrb[0].mxu0 %v1189
    %v1228 = vpop.f32.mrb[0].mxu0
    %v1229 = vadd.f32 0.0, %v1228
    %v1230 = vpop.f32.mrb[0].mxu0
    %v1231 = vpop.f32.mrb[0].mxu0
    %v1232 = vadd.f32 0.0, %v1231
    %v1233 = vpop.f32.mrb[0].mxu0
    %1234 = vdwg.mxu0
    %v1235 = vsel %vm414, %v1178, -inf
    %1236 = vmax.xlane.f32.xlu0 %v1235
    %v1237 = vpop.xlane.xlu0 %1236
    %v1238 = vsel %vm414, %v1181, -inf
    %1239 = vmax.xlane.f32.xlu0 %v1238
    %v1240 = vpop.xlane.xlu0 %1239
    %v1241 = vsel %vm414, %v1229, -inf
    %1242 = vmax.xlane.f32.xlu0 %v1241
    %v1243 = vpop.xlane.xlu0 %1242
    %v1244 = vsel %vm414, %v1232, -inf
    %1245 = vmax.xlane.f32.xlu0 %v1244
    %v1246 = vpop.xlane.xlu0 %1245
    %v1247 = vsub.f32 %v1178, %v1237
    %v1248 = vsub.f32 %v1181, %v1240
    %v1249 = vsub.f32 %v1229, %v1243
    %v1250 = vsub.f32 %v1232, %v1246
    %v1251 = vmul.f32 %v1247, 1.442695
    %v1252 = vpow.pop %v1251
    %v1253 = vmul.f32 %v1248, 1.442695
    %v1254 = vpow.pop %v1253
    %v1255 = vmul.f32 %v1249, 1.442695
    %v1256 = vpow.pop %v1255
    %v1257 = vmul.f32 %v1250, 1.442695
    %v1258 = vpow.pop %v1257
    %v1259 = vsel %vm414, %v1252, 0.0
    %1260 = vadd.xlane.f32.xlu0 %v1259
    %v1261 = vpop.xlane.xlu0 %1260
    %v1262 = vsel %vm414, %v1254, 0.0
    %1263 = vadd.xlane.f32.xlu0 %v1262
    %v1264 = vpop.xlane.xlu0 %1263
    %v1265 = vsel %vm414, %v1256, 0.0
    %1266 = vadd.xlane.f32.xlu0 %v1265
    %v1267 = vpop.xlane.xlu0 %1266
    %v1268 = vsel %vm414, %v1258, 0.0
    %1269 = vadd.xlane.f32.xlu0 %v1268
    %v1270 = vpop.xlane.xlu0 %1269
    %v1271 = vrcp.pop %v1261
    %v1272 = vrcp.pop %v1264
    %v1273 = vrcp.pop %v1267
    %v1274 = vrcp.pop %v1270
    %v1275 = vmul.f32 %v1252, %v1271
    %v1276 = vmul.f32 %v1254, %v1272
    %v1277 = vmul.f32 %v1256, %v1273
    %v1278 = vmul.f32 %v1258, %v1274
    %v1279 = vpack.c.bf16 %v1276, %v1275
    %v1280 = vpack.c.bf16 %v1278, %v1277
    %1281 = vrot.lane.b32.xlu0 %v411, 80
    %v1282 = vpop.permute.xlu0 %1281
    %v1285 = vsel %vm414, %v1279, 0
    %1287 = vmatprep.subr.bf16.mxu0 0
    %1288 = vmatpush1.bf16.msra.mxu0 %v1282
    %1289 = vmatprep.subr.bf16.mxu0 0
    %1290 = vmatpush1.bf16.msra.mxu0 0
    %1291 = vmatprep.subr.bf16.mxu0 0
    %1292 = vmatpush1.bf16.msra.mxu0 0
    %1293 = vmatprep.subr.bf16.mxu0 0
    %1294 = vmatpush1.bf16.msra.mxu0 0
    %1295 = vmatprep.subr.bf16.mxu0 0
    %1296 = vmatpush1.bf16.msra.mxu0 0
    %1297 = vmatprep.subr.bf16.mxu0 0
    %1298 = vmatpush1.bf16.msra.mxu0 0
    %1299 = vmatprep.subr.bf16.mxu0 0
    %1300 = vmatpush1.bf16.msra.mxu0 0
    %1301 = vmatprep.subr.bf16.mxu0 0
    %1302 = vmatpush1.bf16.msra.mxu0 0
    %1303 = vmatprep.subr.bf16.mxu0 0
    %1304 = vmatpush1.bf16.msra.mxu0 0
    %1305 = vmatprep.subr.bf16.mxu0 0
    %1306 = vmatpush1.bf16.msra.mxu0 0
    %1307 = vmatprep.subr.bf16.mxu0 0
    %1308 = vmatpush1.bf16.msra.mxu0 0
    %1309 = vmatprep.subr.bf16.mxu0 0
    %1310 = vmatpush1.bf16.msra.mxu0 0
    %1311 = vmatprep.subr.bf16.mxu0 0
    %1312 = vmatpush1.bf16.msra.mxu0 0
    %1313 = vmatprep.subr.bf16.mxu0 0
    %1314 = vmatpush1.bf16.msra.mxu0 0
    %1315 = vmatprep.subr.bf16.mxu0 0
    %1316 = vmatpush1.bf16.msra.mxu0 0
    %1317 = vmatprep.subr.bf16.mxu0 0
    %1318 = vmatpush1.bf16.msra.mxu0 0
    %1319 = vmatprep.mubr.bf16.mxu0 0
    %1320 = vmatmul.mubr.bf16.gmra.mrb[0].mxu0 %v1285
    %v1321 = vpop.f32.mrb[0].mxu0
    %v1322 = vadd.f32 0.0, %v1321
    %v1323 = vpop.f32.mrb[0].mxu0
    %v1324 = vpop.f32.mrb[0].mxu0
    %v1325 = vadd.f32 0.0, %v1324
    %v1326 = vpop.f32.mrb[0].mxu0
    %1327 = vdwg.mxu0
    %1328 = vrot.lane.b32.xlu0 %v413, 80
    %v1329 = vpop.permute.xlu0 %1328
    %v1332 = vsel %vm414, %v1280, 0
    %1334 = vmatprep.subr.bf16.mxu0 0
    %1335 = vmatpush1.bf16.msra.mxu0 %v1329
    %1336 = vmatprep.subr.bf16.mxu0 0
    %1337 = vmatpush1.bf16.msra.mxu0 0
    %1338 = vmatprep.subr.bf16.mxu0 0
    %1339 = vmatpush1.bf16.msra.mxu0 0
    %1340 = vmatprep.subr.bf16.mxu0 0
    %1341 = vmatpush1.bf16.msra.mxu0 0
    %1342 = vmatprep.subr.bf16.mxu0 0
    %1343 = vmatpush1.bf16.msra.mxu0 0
    %1344 = vmatprep.subr.bf16.mxu0 0
    %1345 = vmatpush1.bf16.msra.mxu0 0
    %1346 = vmatprep.subr.bf16.mxu0 0
    %1347 = vmatpush1.bf16.msra.mxu0 0
    %1348 = vmatprep.subr.bf16.mxu0 0
    %1349 = vmatpush1.bf16.msra.mxu0 0
    %1350 = vmatprep.subr.bf16.mxu0 0
    %1351 = vmatpush1.bf16.msra.mxu0 0
    %1352 = vmatprep.subr.bf16.mxu0 0
    %1353 = vmatpush1.bf16.msra.mxu0 0
    %1354 = vmatprep.subr.bf16.mxu0 0
    %1355 = vmatpush1.bf16.msra.mxu0 0
    %1356 = vmatprep.subr.bf16.mxu0 0
    %1357 = vmatpush1.bf16.msra.mxu0 0
    %1358 = vmatprep.subr.bf16.mxu0 0
    %1359 = vmatpush1.bf16.msra.mxu0 0
    %1360 = vmatprep.subr.bf16.mxu0 0
    %1361 = vmatpush1.bf16.msra.mxu0 0
    %1362 = vmatprep.subr.bf16.mxu0 0
    %1363 = vmatpush1.bf16.msra.mxu0 0
    %1364 = vmatprep.subr.bf16.mxu0 0
    %1365 = vmatpush1.bf16.msra.mxu0 0
    %1366 = vmatprep.mubr.bf16.mxu0 0
    %1367 = vmatmul.mubr.bf16.gmra.mrb[0].mxu0 %v1332
    %v1368 = vpop.f32.mrb[0].mxu0
    %v1369 = vadd.f32 0.0, %v1368
    %v1370 = vpop.f32.mrb[0].mxu0
    %v1371 = vpop.f32.mrb[0].mxu0
    %v1372 = vadd.f32 0.0, %v1371
    %v1373 = vpop.f32.mrb[0].mxu0
    %1374 = vdwg.mxu0
    %1375 = vrot.lane.b32.xlu0 %v408, 64
    %v1376 = vpop.permute.xlu0 %1375
    %1377 = vrot.lane.b32.xlu0 %v410, 64
    %v1378 = vpop.permute.xlu0 %1377
    %v1380 = vsel %vm414, %v1376, 0
    %v1383 = vsel %vm414, %v1378, 0
    %1385 = vmatprep.subr.bf16.mxu0 0
    %1386 = vmatpush1.bf16.xpose.msra.mxu0 %v1383
    %1387 = vmatprep.subr.bf16.mxu0 0
    %1388 = vmatpush1.bf16.xpose.msra.mxu0 0
    %1389 = vmatprep.subr.bf16.mxu0 0
    %1390 = vmatpush1.bf16.xpose.msra.mxu0 0
    %1391 = vmatprep.subr.bf16.mxu0 0
    %1392 = vmatpush1.bf16.xpose.msra.mxu0 0
    %1393 = vmatprep.subr.bf16.mxu0 0
    %1394 = vmatpush1.bf16.xpose.msra.mxu0 0
    %1395 = vmatprep.subr.bf16.mxu0 0
    %1396 = vmatpush1.bf16.xpose.msra.mxu0 0
    %1397 = vmatprep.subr.bf16.mxu0 0
    %1398 = vmatpush1.bf16.xpose.msra.mxu0 0
    %1399 = vmatprep.subr.bf16.mxu0 0
    %1400 = vmatpush1.bf16.xpose.msra.mxu0 0
    %1401 = vmatprep.subr.bf16.mxu0 0
    %1402 = vmatpush1.bf16.xpose.msra.mxu0 0
    %1403 = vmatprep.subr.bf16.mxu0 0
    %1404 = vmatpush1.bf16.xpose.msra.mxu0 0
    %1405 = vmatprep.subr.bf16.mxu0 0
    %1406 = vmatpush1.bf16.xpose.msra.mxu0 0
    %1407 = vmatprep.subr.bf16.mxu0 0
    %1408 = vmatpush1.bf16.xpose.msra.mxu0 0
    %1409 = vmatprep.subr.bf16.mxu0 0
    %1410 = vmatpush1.bf16.xpose.msra.mxu0 0
    %1411 = vmatprep.subr.bf16.mxu0 0
    %1412 = vmatpush1.bf16.xpose.msra.mxu0 0
    %1413 = vmatprep.subr.bf16.mxu0 0
    %1414 = vmatpush1.bf16.xpose.msra.mxu0 0
    %1415 = vmatprep.subr.bf16.mxu0 0
    %1416 = vmatpush1.bf16.xpose.msra.mxu0 0
    %1417 = vmatprep.mubr.bf16.mxu0 0
    %1418 = vmatmul.mubr.bf16.gmra.mrb[0].mxu0 %v1380
    %v1419 = vpop.f32.mrb[0].mxu0
    %v1420 = vadd.f32 0.0, %v1419
    %v1421 = vpop.f32.mrb[0].mxu0
    %v1422 = vpop.f32.mrb[0].mxu0
    %v1423 = vadd.f32 0.0, %v1422
    %v1424 = vpop.f32.mrb[0].mxu0
    %1425 = vdwg.mxu0
    %1426 = vrot.lane.b32.xlu0 %v409, 64
    %v1427 = vpop.permute.xlu0 %1426
    %1428 = vrot.lane.b32.xlu0 %v412, 64
    %v1429 = vpop.permute.xlu0 %1428
    %v1431 = vsel %vm414, %v1427, 0
    %v1434 = vsel %vm414, %v1429, 0
    %1436 = vmatprep.subr.bf16.mxu0 0
    %1437 = vmatpush1.bf16.xpose.msra.mxu0 %v1434
    %1438 = vmatprep.subr.bf16.mxu0 0
    %1439 = vmatpush1.bf16.xpose.msra.mxu0 0
    %1440 = vmatprep.subr.bf16.mxu0 0
    %1441 = vmatpush1.bf16.xpose.msra.mxu0 0
    %1442 = vmatprep.subr.bf16.mxu0 0
    %1443 = vmatpush1.bf16.xpose.msra.mxu0 0
    %1444 = vmatprep.subr.bf16.mxu0 0
    %1445 = vmatpush1.bf16.xpose.msra.mxu0 0
    %1446 = vmatprep.subr.bf16.mxu0 0
    %1447 = vmatpush1.bf16.xpose.msra.mxu0 0
    %1448 = vmatprep.subr.bf16.mxu0 0
    %1449 = vmatpush1.bf16.xpose.msra.mxu0 0
    %1450 = vmatprep.subr.bf16.mxu0 0
    %1451 = vmatpush1.bf16.xpose.msra.mxu0 0
    %1452 = vmatprep.subr.bf16.mxu0 0
    %1453 = vmatpush1.bf16.xpose.msra.mxu0 0
    %1454 = vmatprep.subr.bf16.mxu0 0
    %1455 = vmatpush1.bf16.xpose.msra.mxu0 0
    %1456 = vmatprep.subr.bf16.mxu0 0
    %1457 = vmatpush1.bf16.xpose.msra.mxu0 0
    %1458 = vmatprep.subr.bf16.mxu0 0
    %1459 = vmatpush1.bf16.xpose.msra.mxu0 0
    %1460 = vmatprep.subr.bf16.mxu0 0
    %1461 = vmatpush1.bf16.xpose.msra.mxu0 0
    %1462 = vmatprep.subr.bf16.mxu0 0
    %1463 = vmatpush1.bf16.xpose.msra.mxu0 0
    %1464 = vmatprep.subr.bf16.mxu0 0
    %1465 = vmatpush1.bf16.xpose.msra.mxu0 0
    %1466 = vmatprep.subr.bf16.mxu0 0
    %1467 = vmatpush1.bf16.xpose.msra.mxu0 0
    %1468 = vmatprep.mubr.bf16.mxu0 0
    %1469 = vmatmul.mubr.bf16.gmra.mrb[0].mxu0 %v1431
    %v1470 = vpop.f32.mrb[0].mxu0
    %v1471 = vadd.f32 0.0, %v1470
    %v1472 = vpop.f32.mrb[0].mxu0
    %v1473 = vpop.f32.mrb[0].mxu0
    %v1474 = vadd.f32 0.0, %v1473
    %v1475 = vpop.f32.mrb[0].mxu0
    %1476 = vdwg.mxu0
    %v1477 = vsel %vm414, %v1420, -inf
    %1478 = vmax.xlane.f32.xlu0 %v1477
    %v1479 = vpop.xlane.xlu0 %1478
    %v1480 = vsel %vm414, %v1423, -inf
    %1481 = vmax.xlane.f32.xlu0 %v1480
    %v1482 = vpop.xlane.xlu0 %1481
    %v1483 = vsel %vm414, %v1471, -inf
    %1484 = vmax.xlane.f32.xlu0 %v1483
    %v1485 = vpop.xlane.xlu0 %1484
    %v1486 = vsel %vm414, %v1474, -inf
    %1487 = vmax.xlane.f32.xlu0 %v1486
    %v1488 = vpop.xlane.xlu0 %1487
    %v1489 = vsub.f32 %v1420, %v1479
    %v1490 = vsub.f32 %v1423, %v1482
    %v1491 = vsub.f32 %v1471, %v1485
    %v1492 = vsub.f32 %v1474, %v1488
    %v1493 = vmul.f32 %v1489, 1.442695
    %v1494 = vpow.pop %v1493
    %v1495 = vmul.f32 %v1490, 1.442695
    %v1496 = vpow.pop %v1495
    %v1497 = vmul.f32 %v1491, 1.442695
    %v1498 = vpow.pop %v1497
    %v1499 = vmul.f32 %v1492, 1.442695
    %v1500 = vpow.pop %v1499
    %v1501 = vsel %vm414, %v1494, 0.0
    %1502 = vadd.xlane.f32.xlu0 %v1501
    %v1503 = vpop.xlane.xlu0 %1502
    %v1504 = vsel %vm414, %v1496, 0.0
    %1505 = vadd.xlane.f32.xlu0 %v1504
    %v1506 = vpop.xlane.xlu0 %1505
    %v1507 = vsel %vm414, %v1498, 0.0
    %1508 = vadd.xlane.f32.xlu0 %v1507
    %v1509 = vpop.xlane.xlu0 %1508
    %v1510 = vsel %vm414, %v1500, 0.0
    %1511 = vadd.xlane.f32.xlu0 %v1510
    %v1512 = vpop.xlane.xlu0 %1511
    %v1513 = vrcp.pop %v1503
    %v1514 = vrcp.pop %v1506
    %v1515 = vrcp.pop %v1509
    %v1516 = vrcp.pop %v1512
    %v1517 = vmul.f32 %v1494, %v1513
    %v1518 = vmul.f32 %v1496, %v1514
    %v1519 = vmul.f32 %v1498, %v1515
    %v1520 = vmul.f32 %v1500, %v1516
    %v1521 = vpack.c.bf16 %v1518, %v1517
    %v1522 = vpack.c.bf16 %v1520, %v1519
    %1523 = vrot.lane.b32.xlu0 %v411, 64
    %v1524 = vpop.permute.xlu0 %1523
    %v1527 = vsel %vm414, %v1521, 0
    %1529 = vmatprep.subr.bf16.mxu0 0
    %1530 = vmatpush1.bf16.msra.mxu0 %v1524
    %1531 = vmatprep.subr.bf16.mxu0 0
    %1532 = vmatpush1.bf16.msra.mxu0 0
    %1533 = vmatprep.subr.bf16.mxu0 0
    %1534 = vmatpush1.bf16.msra.mxu0 0
    %1535 = vmatprep.subr.bf16.mxu0 0
    %1536 = vmatpush1.bf16.msra.mxu0 0
    %1537 = vmatprep.subr.bf16.mxu0 0
    %1538 = vmatpush1.bf16.msra.mxu0 0
    %1539 = vmatprep.subr.bf16.mxu0 0
    %1540 = vmatpush1.bf16.msra.mxu0 0
    %1541 = vmatprep.subr.bf16.mxu0 0
    %1542 = vmatpush1.bf16.msra.mxu0 0
    %1543 = vmatprep.subr.bf16.mxu0 0
    %1544 = vmatpush1.bf16.msra.mxu0 0
    %1545 = vmatprep.subr.bf16.mxu0 0
    %1546 = vmatpush1.bf16.msra.mxu0 0
    %1547 = vmatprep.subr.bf16.mxu0 0
    %1548 = vmatpush1.bf16.msra.mxu0 0
    %1549 = vmatprep.subr.bf16.mxu0 0
    %1550 = vmatpush1.bf16.msra.mxu0 0
    %1551 = vmatprep.subr.bf16.mxu0 0
    %1552 = vmatpush1.bf16.msra.mxu0 0
    %1553 = vmatprep.subr.bf16.mxu0 0
    %1554 = vmatpush1.bf16.msra.mxu0 0
    %1555 = vmatprep.subr.bf16.mxu0 0
    %1556 = vmatpush1.bf16.msra.mxu0 0
    %1557 = vmatprep.subr.bf16.mxu0 0
    %1558 = vmatpush1.bf16.msra.mxu0 0
    %1559 = vmatprep.subr.bf16.mxu0 0
    %1560 = vmatpush1.bf16.msra.mxu0 0
    %1561 = vmatprep.mubr.bf16.mxu0 0
    %1562 = vmatmul.mubr.bf16.gmra.mrb[0].mxu0 %v1527
    %v1563 = vpop.f32.mrb[0].mxu0
    %v1564 = vadd.f32 0.0, %v1563
    %v1565 = vpop.f32.mrb[0].mxu0
    %v1566 = vpop.f32.mrb[0].mxu0
    %v1567 = vadd.f32 0.0, %v1566
    %v1568 = vpop.f32.mrb[0].mxu0
    %1569 = vdwg.mxu0
    %1570 = vrot.lane.b32.xlu0 %v413, 64
    %v1571 = vpop.permute.xlu0 %1570
    %v1574 = vsel %vm414, %v1522, 0
    %1576 = vmatprep.subr.bf16.mxu0 0
    %1577 = vmatpush1.bf16.msra.mxu0 %v1571
    %1578 = vmatprep.subr.bf16.mxu0 0
    %1579 = vmatpush1.bf16.msra.mxu0 0
    %1580 = vmatprep.subr.bf16.mxu0 0
    %1581 = vmatpush1.bf16.msra.mxu0 0
    %1582 = vmatprep.subr.bf16.mxu0 0
    %1583 = vmatpush1.bf16.msra.mxu0 0
    %1584 = vmatprep.subr.bf16.mxu0 0
    %1585 = vmatpush1.bf16.msra.mxu0 0
    %1586 = vmatprep.subr.bf16.mxu0 0
    %1587 = vmatpush1.bf16.msra.mxu0 0
    %1588 = vmatprep.subr.bf16.mxu0 0
    %1589 = vmatpush1.bf16.msra.mxu0 0
    %1590 = vmatprep.subr.bf16.mxu0 0
    %1591 = vmatpush1.bf16.msra.mxu0 0
    %1592 = vmatprep.subr.bf16.mxu0 0
    %1593 = vmatpush1.bf16.msra.mxu0 0
    %1594 = vmatprep.subr.bf16.mxu0 0
    %1595 = vmatpush1.bf16.msra.mxu0 0
    %1596 = vmatprep.subr.bf16.mxu0 0
    %1597 = vmatpush1.bf16.msra.mxu0 0
    %1598 = vmatprep.subr.bf16.mxu0 0
    %1599 = vmatpush1.bf16.msra.mxu0 0
    %1600 = vmatprep.subr.bf16.mxu0 0
    %1601 = vmatpush1.bf16.msra.mxu0 0
    %1602 = vmatprep.subr.bf16.mxu0 0
    %1603 = vmatpush1.bf16.msra.mxu0 0
    %1604 = vmatprep.subr.bf16.mxu0 0
    %1605 = vmatpush1.bf16.msra.mxu0 0
    %1606 = vmatprep.subr.bf16.mxu0 0
    %1607 = vmatpush1.bf16.msra.mxu0 0
    %1608 = vmatprep.mubr.bf16.mxu0 0
    %1609 = vmatmul.mubr.bf16.gmra.mrb[0].mxu0 %v1574
    %v1610 = vpop.f32.mrb[0].mxu0
    %v1611 = vadd.f32 0.0, %v1610
    %v1612 = vpop.f32.mrb[0].mxu0
    %v1613 = vpop.f32.mrb[0].mxu0
    %v1614 = vadd.f32 0.0, %v1613
    %v1615 = vpop.f32.mrb[0].mxu0
    %1616 = vdwg.mxu0
    %1617 = vrot.lane.b32.xlu0 %v408, 48
    %v1618 = vpop.permute.xlu0 %1617
    %1619 = vrot.lane.b32.xlu0 %v410, 48
    %v1620 = vpop.permute.xlu0 %1619
    %v1622 = vsel %vm414, %v1618, 0
    %v1625 = vsel %vm414, %v1620, 0
    %1627 = vmatprep.subr.bf16.mxu0 0
    %1628 = vmatpush1.bf16.xpose.msra.mxu0 %v1625
    %1629 = vmatprep.subr.bf16.mxu0 0
    %1630 = vmatpush1.bf16.xpose.msra.mxu0 0
    %1631 = vmatprep.subr.bf16.mxu0 0
    %1632 = vmatpush1.bf16.xpose.msra.mxu0 0
    %1633 = vmatprep.subr.bf16.mxu0 0
    %1634 = vmatpush1.bf16.xpose.msra.mxu0 0
    %1635 = vmatprep.subr.bf16.mxu0 0
    %1636 = vmatpush1.bf16.xpose.msra.mxu0 0
    %1637 = vmatprep.subr.bf16.mxu0 0
    %1638 = vmatpush1.bf16.xpose.msra.mxu0 0
    %1639 = vmatprep.subr.bf16.mxu0 0
    %1640 = vmatpush1.bf16.xpose.msra.mxu0 0
    %1641 = vmatprep.subr.bf16.mxu0 0
    %1642 = vmatpush1.bf16.xpose.msra.mxu0 0
    %1643 = vmatprep.subr.bf16.mxu0 0
    %1644 = vmatpush1.bf16.xpose.msra.mxu0 0
    %1645 = vmatprep.subr.bf16.mxu0 0
    %1646 = vmatpush1.bf16.xpose.msra.mxu0 0
    %1647 = vmatprep.subr.bf16.mxu0 0
    %1648 = vmatpush1.bf16.xpose.msra.mxu0 0
    %1649 = vmatprep.subr.bf16.mxu0 0
    %1650 = vmatpush1.bf16.xpose.msra.mxu0 0
    %1651 = vmatprep.subr.bf16.mxu0 0
    %1652 = vmatpush1.bf16.xpose.msra.mxu0 0
    %1653 = vmatprep.subr.bf16.mxu0 0
    %1654 = vmatpush1.bf16.xpose.msra.mxu0 0
    %1655 = vmatprep.subr.bf16.mxu0 0
    %1656 = vmatpush1.bf16.xpose.msra.mxu0 0
    %1657 = vmatprep.subr.bf16.mxu0 0
    %1658 = vmatpush1.bf16.xpose.msra.mxu0 0
    %1659 = vmatprep.mubr.bf16.mxu0 0
    %1660 = vmatmul.mubr.bf16.gmra.mrb[0].mxu0 %v1622
    %v1661 = vpop.f32.mrb[0].mxu0
    %v1662 = vadd.f32 0.0, %v1661
    %v1663 = vpop.f32.mrb[0].mxu0
    %v1664 = vpop.f32.mrb[0].mxu0
    %v1665 = vadd.f32 0.0, %v1664
    %v1666 = vpop.f32.mrb[0].mxu0
    %1667 = vdwg.mxu0
    %1668 = vrot.lane.b32.xlu0 %v409, 48
    %v1669 = vpop.permute.xlu0 %1668
    %1670 = vrot.lane.b32.xlu0 %v412, 48
    %v1671 = vpop.permute.xlu0 %1670
    %v1673 = vsel %vm414, %v1669, 0
    %v1676 = vsel %vm414, %v1671, 0
    %1678 = vmatprep.subr.bf16.mxu0 0
    %1679 = vmatpush1.bf16.xpose.msra.mxu0 %v1676
    %1680 = vmatprep.subr.bf16.mxu0 0
    %1681 = vmatpush1.bf16.xpose.msra.mxu0 0
    %1682 = vmatprep.subr.bf16.mxu0 0
    %1683 = vmatpush1.bf16.xpose.msra.mxu0 0
    %1684 = vmatprep.subr.bf16.mxu0 0
    %1685 = vmatpush1.bf16.xpose.msra.mxu0 0
    %1686 = vmatprep.subr.bf16.mxu0 0
    %1687 = vmatpush1.bf16.xpose.msra.mxu0 0
    %1688 = vmatprep.subr.bf16.mxu0 0
    %1689 = vmatpush1.bf16.xpose.msra.mxu0 0
    %1690 = vmatprep.subr.bf16.mxu0 0
    %1691 = vmatpush1.bf16.xpose.msra.mxu0 0
    %1692 = vmatprep.subr.bf16.mxu0 0
    %1693 = vmatpush1.bf16.xpose.msra.mxu0 0
    %1694 = vmatprep.subr.bf16.mxu0 0
    %1695 = vmatpush1.bf16.xpose.msra.mxu0 0
    %1696 = vmatprep.subr.bf16.mxu0 0
    %1697 = vmatpush1.bf16.xpose.msra.mxu0 0
    %1698 = vmatprep.subr.bf16.mxu0 0
    %1699 = vmatpush1.bf16.xpose.msra.mxu0 0
    %1700 = vmatprep.subr.bf16.mxu0 0
    %1701 = vmatpush1.bf16.xpose.msra.mxu0 0
    %1702 = vmatprep.subr.bf16.mxu0 0
    %1703 = vmatpush1.bf16.xpose.msra.mxu0 0
    %1704 = vmatprep.subr.bf16.mxu0 0
    %1705 = vmatpush1.bf16.xpose.msra.mxu0 0
    %1706 = vmatprep.subr.bf16.mxu0 0
    %1707 = vmatpush1.bf16.xpose.msra.mxu0 0
    %1708 = vmatprep.subr.bf16.mxu0 0
    %1709 = vmatpush1.bf16.xpose.msra.mxu0 0
    %1710 = vmatprep.mubr.bf16.mxu0 0
    %1711 = vmatmul.mubr.bf16.gmra.mrb[0].mxu0 %v1673
    %v1712 = vpop.f32.mrb[0].mxu0
    %v1713 = vadd.f32 0.0, %v1712
    %v1714 = vpop.f32.mrb[0].mxu0
    %v1715 = vpop.f32.mrb[0].mxu0
    %v1716 = vadd.f32 0.0, %v1715
    %v1717 = vpop.f32.mrb[0].mxu0
    %1718 = vdwg.mxu0
    %v1719 = vsel %vm414, %v1662, -inf
    %1720 = vmax.xlane.f32.xlu0 %v1719
    %v1721 = vpop.xlane.xlu0 %1720
    %v1722 = vsel %vm414, %v1665, -inf
    %1723 = vmax.xlane.f32.xlu0 %v1722
    %v1724 = vpop.xlane.xlu0 %1723
    %v1725 = vsel %vm414, %v1713, -inf
    %1726 = vmax.xlane.f32.xlu0 %v1725
    %v1727 = vpop.xlane.xlu0 %1726
    %v1728 = vsel %vm414, %v1716, -inf
    %1729 = vmax.xlane.f32.xlu0 %v1728
    %v1730 = vpop.xlane.xlu0 %1729
    %v1731 = vsub.f32 %v1662, %v1721
    %v1732 = vsub.f32 %v1665, %v1724
    %v1733 = vsub.f32 %v1713, %v1727
    %v1734 = vsub.f32 %v1716, %v1730
    %v1735 = vmul.f32 %v1731, 1.442695
    %v1736 = vpow.pop %v1735
    %v1737 = vmul.f32 %v1732, 1.442695
    %v1738 = vpow.pop %v1737
    %v1739 = vmul.f32 %v1733, 1.442695
    %v1740 = vpow.pop %v1739
    %v1741 = vmul.f32 %v1734, 1.442695
    %v1742 = vpow.pop %v1741
    %v1743 = vsel %vm414, %v1736, 0.0
    %1744 = vadd.xlane.f32.xlu0 %v1743
    %v1745 = vpop.xlane.xlu0 %1744
    %v1746 = vsel %vm414, %v1738, 0.0
    %1747 = vadd.xlane.f32.xlu0 %v1746
    %v1748 = vpop.xlane.xlu0 %1747
    %v1749 = vsel %vm414, %v1740, 0.0
    %1750 = vadd.xlane.f32.xlu0 %v1749
    %v1751 = vpop.xlane.xlu0 %1750
    %v1752 = vsel %vm414, %v1742, 0.0
    %1753 = vadd.xlane.f32.xlu0 %v1752
    %v1754 = vpop.xlane.xlu0 %1753
    %v1755 = vrcp.pop %v1745
    %v1756 = vrcp.pop %v1748
    %v1757 = vrcp.pop %v1751
    %v1758 = vrcp.pop %v1754
    %v1759 = vmul.f32 %v1736, %v1755
    %v1760 = vmul.f32 %v1738, %v1756
    %v1761 = vmul.f32 %v1740, %v1757
    %v1762 = vmul.f32 %v1742, %v1758
    %v1763 = vpack.c.bf16 %v1760, %v1759
    %v1764 = vpack.c.bf16 %v1762, %v1761
    %1765 = vrot.lane.b32.xlu0 %v411, 48
    %v1766 = vpop.permute.xlu0 %1765
    %v1769 = vsel %vm414, %v1763, 0
    %1771 = vmatprep.subr.bf16.mxu0 0
    %1772 = vmatpush1.bf16.msra.mxu0 %v1766
    %1773 = vmatprep.subr.bf16.mxu0 0
    %1774 = vmatpush1.bf16.msra.mxu0 0
    %1775 = vmatprep.subr.bf16.mxu0 0
    %1776 = vmatpush1.bf16.msra.mxu0 0
    %1777 = vmatprep.subr.bf16.mxu0 0
    %1778 = vmatpush1.bf16.msra.mxu0 0
    %1779 = vmatprep.subr.bf16.mxu0 0
    %1780 = vmatpush1.bf16.msra.mxu0 0
    %1781 = vmatprep.subr.bf16.mxu0 0
    %1782 = vmatpush1.bf16.msra.mxu0 0
    %1783 = vmatprep.subr.bf16.mxu0 0
    %1784 = vmatpush1.bf16.msra.mxu0 0
    %1785 = vmatprep.subr.bf16.mxu0 0
    %1786 = vmatpush1.bf16.msra.mxu0 0
    %1787 = vmatprep.subr.bf16.mxu0 0
    %1788 = vmatpush1.bf16.msra.mxu0 0
    %1789 = vmatprep.subr.bf16.mxu0 0
    %1790 = vmatpush1.bf16.msra.mxu0 0
    %1791 = vmatprep.subr.bf16.mxu0 0
    %1792 = vmatpush1.bf16.msra.mxu0 0
    %1793 = vmatprep.subr.bf16.mxu0 0
    %1794 = vmatpush1.bf16.msra.mxu0 0
    %1795 = vmatprep.subr.bf16.mxu0 0
    %1796 = vmatpush1.bf16.msra.mxu0 0
    %1797 = vmatprep.subr.bf16.mxu0 0
    %1798 = vmatpush1.bf16.msra.mxu0 0
    %1799 = vmatprep.subr.bf16.mxu0 0
    %1800 = vmatpush1.bf16.msra.mxu0 0
    %1801 = vmatprep.subr.bf16.mxu0 0
    %1802 = vmatpush1.bf16.msra.mxu0 0
    %1803 = vmatprep.mubr.bf16.mxu0 0
    %1804 = vmatmul.mubr.bf16.gmra.mrb[0].mxu0 %v1769
    %v1805 = vpop.f32.mrb[0].mxu0
    %v1806 = vadd.f32 0.0, %v1805
    %v1807 = vpop.f32.mrb[0].mxu0
    %v1808 = vpop.f32.mrb[0].mxu0
    %v1809 = vadd.f32 0.0, %v1808
    %v1810 = vpop.f32.mrb[0].mxu0
    %1811 = vdwg.mxu0
    %1812 = vrot.lane.b32.xlu0 %v413, 48
    %v1813 = vpop.permute.xlu0 %1812
    %v1816 = vsel %vm414, %v1764, 0
    %1818 = vmatprep.subr.bf16.mxu0 0
    %1819 = vmatpush1.bf16.msra.mxu0 %v1813
    %1820 = vmatprep.subr.bf16.mxu0 0
    %1821 = vmatpush1.bf16.msra.mxu0 0
    %1822 = vmatprep.subr.bf16.mxu0 0
    %1823 = vmatpush1.bf16.msra.mxu0 0
    %1824 = vmatprep.subr.bf16.mxu0 0
    %1825 = vmatpush1.bf16.msra.mxu0 0
    %1826 = vmatprep.subr.bf16.mxu0 0
    %1827 = vmatpush1.bf16.msra.mxu0 0
    %1828 = vmatprep.subr.bf16.mxu0 0
    %1829 = vmatpush1.bf16.msra.mxu0 0
    %1830 = vmatprep.subr.bf16.mxu0 0
    %1831 = vmatpush1.bf16.msra.mxu0 0
    %1832 = vmatprep.subr.bf16.mxu0 0
    %1833 = vmatpush1.bf16.msra.mxu0 0
    %1834 = vmatprep.subr.bf16.mxu0 0
    %1835 = vmatpush1.bf16.msra.mxu0 0
    %1836 = vmatprep.subr.bf16.mxu0 0
    %1837 = vmatpush1.bf16.msra.mxu0 0
    %1838 = vmatprep.subr.bf16.mxu0 0
    %1839 = vmatpush1.bf16.msra.mxu0 0
    %1840 = vmatprep.subr.bf16.mxu0 0
    %1841 = vmatpush1.bf16.msra.mxu0 0
    %1842 = vmatprep.subr.bf16.mxu0 0
    %1843 = vmatpush1.bf16.msra.mxu0 0
    %1844 = vmatprep.subr.bf16.mxu0 0
    %1845 = vmatpush1.bf16.msra.mxu0 0
    %1846 = vmatprep.subr.bf16.mxu0 0
    %1847 = vmatpush1.bf16.msra.mxu0 0
    %1848 = vmatprep.subr.bf16.mxu0 0
    %1849 = vmatpush1.bf16.msra.mxu0 0
    %1850 = vmatprep.mubr.bf16.mxu0 0
    %1851 = vmatmul.mubr.bf16.gmra.mrb[0].mxu0 %v1816
    %v1852 = vpop.f32.mrb[0].mxu0
    %v1853 = vadd.f32 0.0, %v1852
    %v1854 = vpop.f32.mrb[0].mxu0
    %v1855 = vpop.f32.mrb[0].mxu0
    %v1856 = vadd.f32 0.0, %v1855
    %v1857 = vpop.f32.mrb[0].mxu0
    %1858 = vdwg.mxu0
    %1859 = vrot.lane.b32.xlu0 %v408, 32
    %v1860 = vpop.permute.xlu0 %1859
    %1861 = vrot.lane.b32.xlu0 %v410, 32
    %v1862 = vpop.permute.xlu0 %1861
    %v1864 = vsel %vm414, %v1860, 0
    %v1867 = vsel %vm414, %v1862, 0
    %1869 = vmatprep.subr.bf16.mxu0 0
    %1870 = vmatpush1.bf16.xpose.msra.mxu0 %v1867
    %1871 = vmatprep.subr.bf16.mxu0 0
    %1872 = vmatpush1.bf16.xpose.msra.mxu0 0
    %1873 = vmatprep.subr.bf16.mxu0 0
    %1874 = vmatpush1.bf16.xpose.msra.mxu0 0
    %1875 = vmatprep.subr.bf16.mxu0 0
    %1876 = vmatpush1.bf16.xpose.msra.mxu0 0
    %1877 = vmatprep.subr.bf16.mxu0 0
    %1878 = vmatpush1.bf16.xpose.msra.mxu0 0
    %1879 = vmatprep.subr.bf16.mxu0 0
    %1880 = vmatpush1.bf16.xpose.msra.mxu0 0
    %1881 = vmatprep.subr.bf16.mxu0 0
    %1882 = vmatpush1.bf16.xpose.msra.mxu0 0
    %1883 = vmatprep.subr.bf16.mxu0 0
    %1884 = vmatpush1.bf16.xpose.msra.mxu0 0
    %1885 = vmatprep.subr.bf16.mxu0 0
    %1886 = vmatpush1.bf16.xpose.msra.mxu0 0
    %1887 = vmatprep.subr.bf16.mxu0 0
    %1888 = vmatpush1.bf16.xpose.msra.mxu0 0
    %1889 = vmatprep.subr.bf16.mxu0 0
    %1890 = vmatpush1.bf16.xpose.msra.mxu0 0
    %1891 = vmatprep.subr.bf16.mxu0 0
    %1892 = vmatpush1.bf16.xpose.msra.mxu0 0
    %1893 = vmatprep.subr.bf16.mxu0 0
    %1894 = vmatpush1.bf16.xpose.msra.mxu0 0
    %1895 = vmatprep.subr.bf16.mxu0 0
    %1896 = vmatpush1.bf16.xpose.msra.mxu0 0
    %1897 = vmatprep.subr.bf16.mxu0 0
    %1898 = vmatpush1.bf16.xpose.msra.mxu0 0
    %1899 = vmatprep.subr.bf16.mxu0 0
    %1900 = vmatpush1.bf16.xpose.msra.mxu0 0
    %1901 = vmatprep.mubr.bf16.mxu0 0
    %1902 = vmatmul.mubr.bf16.gmra.mrb[0].mxu0 %v1864
    %v1903 = vpop.f32.mrb[0].mxu0
    %v1904 = vadd.f32 0.0, %v1903
    %v1905 = vpop.f32.mrb[0].mxu0
    %v1906 = vpop.f32.mrb[0].mxu0
    %v1907 = vadd.f32 0.0, %v1906
    %v1908 = vpop.f32.mrb[0].mxu0
    %1909 = vdwg.mxu0
    %1910 = vrot.lane.b32.xlu0 %v409, 32
    %v1911 = vpop.permute.xlu0 %1910
    %1912 = vrot.lane.b32.xlu0 %v412, 32
    %v1913 = vpop.permute.xlu0 %1912
    %v1915 = vsel %vm414, %v1911, 0
    %v1918 = vsel %vm414, %v1913, 0
    %1920 = vmatprep.subr.bf16.mxu0 0
    %1921 = vmatpush1.bf16.xpose.msra.mxu0 %v1918
    %1922 = vmatprep.subr.bf16.mxu0 0
    %1923 = vmatpush1.bf16.xpose.msra.mxu0 0
    %1924 = vmatprep.subr.bf16.mxu0 0
    %1925 = vmatpush1.bf16.xpose.msra.mxu0 0
    %1926 = vmatprep.subr.bf16.mxu0 0
    %1927 = vmatpush1.bf16.xpose.msra.mxu0 0
    %1928 = vmatprep.subr.bf16.mxu0 0
    %1929 = vmatpush1.bf16.xpose.msra.mxu0 0
    %1930 = vmatprep.subr.bf16.mxu0 0
    %1931 = vmatpush1.bf16.xpose.msra.mxu0 0
    %1932 = vmatprep.subr.bf16.mxu0 0
    %1933 = vmatpush1.bf16.xpose.msra.mxu0 0
    %1934 = vmatprep.subr.bf16.mxu0 0
    %1935 = vmatpush1.bf16.xpose.msra.mxu0 0
    %1936 = vmatprep.subr.bf16.mxu0 0
    %1937 = vmatpush1.bf16.xpose.msra.mxu0 0
    %1938 = vmatprep.subr.bf16.mxu0 0
    %1939 = vmatpush1.bf16.xpose.msra.mxu0 0
    %1940 = vmatprep.subr.bf16.mxu0 0
    %1941 = vmatpush1.bf16.xpose.msra.mxu0 0
    %1942 = vmatprep.subr.bf16.mxu0 0
    %1943 = vmatpush1.bf16.xpose.msra.mxu0 0
    %1944 = vmatprep.subr.bf16.mxu0 0
    %1945 = vmatpush1.bf16.xpose.msra.mxu0 0
    %1946 = vmatprep.subr.bf16.mxu0 0
    %1947 = vmatpush1.bf16.xpose.msra.mxu0 0
    %1948 = vmatprep.subr.bf16.mxu0 0
    %1949 = vmatpush1.bf16.xpose.msra.mxu0 0
    %1950 = vmatprep.subr.bf16.mxu0 0
    %1951 = vmatpush1.bf16.xpose.msra.mxu0 0
    %1952 = vmatprep.mubr.bf16.mxu0 0
    %1953 = vmatmul.mubr.bf16.gmra.mrb[0].mxu0 %v1915
    %v1954 = vpop.f32.mrb[0].mxu0
    %v1955 = vadd.f32 0.0, %v1954
    %v1956 = vpop.f32.mrb[0].mxu0
    %v1957 = vpop.f32.mrb[0].mxu0
    %v1958 = vadd.f32 0.0, %v1957
    %v1959 = vpop.f32.mrb[0].mxu0
    %1960 = vdwg.mxu0
    %v1961 = vsel %vm414, %v1904, -inf
    %1962 = vmax.xlane.f32.xlu0 %v1961
    %v1963 = vpop.xlane.xlu0 %1962
    %v1964 = vsel %vm414, %v1907, -inf
    %1965 = vmax.xlane.f32.xlu0 %v1964
    %v1966 = vpop.xlane.xlu0 %1965
    %v1967 = vsel %vm414, %v1955, -inf
    %1968 = vmax.xlane.f32.xlu0 %v1967
    %v1969 = vpop.xlane.xlu0 %1968
    %v1970 = vsel %vm414, %v1958, -inf
    %1971 = vmax.xlane.f32.xlu0 %v1970
    %v1972 = vpop.xlane.xlu0 %1971
    %v1973 = vsub.f32 %v1904, %v1963
    %v1974 = vsub.f32 %v1907, %v1966
    %v1975 = vsub.f32 %v1955, %v1969
    %v1976 = vsub.f32 %v1958, %v1972
    %v1977 = vmul.f32 %v1973, 1.442695
    %v1978 = vpow.pop %v1977
    %v1979 = vmul.f32 %v1974, 1.442695
    %v1980 = vpow.pop %v1979
    %v1981 = vmul.f32 %v1975, 1.442695
    %v1982 = vpow.pop %v1981
    %v1983 = vmul.f32 %v1976, 1.442695
    %v1984 = vpow.pop %v1983
    %v1985 = vsel %vm414, %v1978, 0.0
    %1986 = vadd.xlane.f32.xlu0 %v1985
    %v1987 = vpop.xlane.xlu0 %1986
    %v1988 = vsel %vm414, %v1980, 0.0
    %1989 = vadd.xlane.f32.xlu0 %v1988
    %v1990 = vpop.xlane.xlu0 %1989
    %v1991 = vsel %vm414, %v1982, 0.0
    %1992 = vadd.xlane.f32.xlu0 %v1991
    %v1993 = vpop.xlane.xlu0 %1992
    %v1994 = vsel %vm414, %v1984, 0.0
    %1995 = vadd.xlane.f32.xlu0 %v1994
    %v1996 = vpop.xlane.xlu0 %1995
    %v1997 = vrcp.pop %v1987
    %v1998 = vrcp.pop %v1990
    %v1999 = vrcp.pop %v1993
    %v2000 = vrcp.pop %v1996
    %v2001 = vmul.f32 %v1978, %v1997
    %v2002 = vmul.f32 %v1980, %v1998
    %v2003 = vmul.f32 %v1982, %v1999
    %v2004 = vmul.f32 %v1984, %v2000
    %v2005 = vpack.c.bf16 %v2002, %v2001
    %v2006 = vpack.c.bf16 %v2004, %v2003
    %2007 = vrot.lane.b32.xlu0 %v411, 32
    %v2008 = vpop.permute.xlu0 %2007
    %v2011 = vsel %vm414, %v2005, 0
    %2013 = vmatprep.subr.bf16.mxu0 0
    %2014 = vmatpush1.bf16.msra.mxu0 %v2008
    %2015 = vmatprep.subr.bf16.mxu0 0
    %2016 = vmatpush1.bf16.msra.mxu0 0
    %2017 = vmatprep.subr.bf16.mxu0 0
    %2018 = vmatpush1.bf16.msra.mxu0 0
    %2019 = vmatprep.subr.bf16.mxu0 0
    %2020 = vmatpush1.bf16.msra.mxu0 0
    %2021 = vmatprep.subr.bf16.mxu0 0
    %2022 = vmatpush1.bf16.msra.mxu0 0
    %2023 = vmatprep.subr.bf16.mxu0 0
    %2024 = vmatpush1.bf16.msra.mxu0 0
    %2025 = vmatprep.subr.bf16.mxu0 0
    %2026 = vmatpush1.bf16.msra.mxu0 0
    %2027 = vmatprep.subr.bf16.mxu0 0
    %2028 = vmatpush1.bf16.msra.mxu0 0
    %2029 = vmatprep.subr.bf16.mxu0 0
    %2030 = vmatpush1.bf16.msra.mxu0 0
    %2031 = vmatprep.subr.bf16.mxu0 0
    %2032 = vmatpush1.bf16.msra.mxu0 0
    %2033 = vmatprep.subr.bf16.mxu0 0
    %2034 = vmatpush1.bf16.msra.mxu0 0
    %2035 = vmatprep.subr.bf16.mxu0 0
    %2036 = vmatpush1.bf16.msra.mxu0 0
    %2037 = vmatprep.subr.bf16.mxu0 0
    %2038 = vmatpush1.bf16.msra.mxu0 0
    %2039 = vmatprep.subr.bf16.mxu0 0
    %2040 = vmatpush1.bf16.msra.mxu0 0
    %2041 = vmatprep.subr.bf16.mxu0 0
    %2042 = vmatpush1.bf16.msra.mxu0 0
    %2043 = vmatprep.subr.bf16.mxu0 0
    %2044 = vmatpush1.bf16.msra.mxu0 0
    %2045 = vmatprep.mubr.bf16.mxu0 0
    %2046 = vmatmul.mubr.bf16.gmra.mrb[0].mxu0 %v2011
    %v2047 = vpop.f32.mrb[0].mxu0
    %v2048 = vadd.f32 0.0, %v2047
    %v2049 = vpop.f32.mrb[0].mxu0
    %v2050 = vpop.f32.mrb[0].mxu0
    %v2051 = vadd.f32 0.0, %v2050
    %v2052 = vpop.f32.mrb[0].mxu0
    %2053 = vdwg.mxu0
    %2054 = vrot.lane.b32.xlu0 %v413, 32
    %v2055 = vpop.permute.xlu0 %2054
    %v2058 = vsel %vm414, %v2006, 0
    %2060 = vmatprep.subr.bf16.mxu0 0
    %2061 = vmatpush1.bf16.msra.mxu0 %v2055
    %2062 = vmatprep.subr.bf16.mxu0 0
    %2063 = vmatpush1.bf16.msra.mxu0 0
    %2064 = vmatprep.subr.bf16.mxu0 0
    %2065 = vmatpush1.bf16.msra.mxu0 0
    %2066 = vmatprep.subr.bf16.mxu0 0
    %2067 = vmatpush1.bf16.msra.mxu0 0
    %2068 = vmatprep.subr.bf16.mxu0 0
    %2069 = vmatpush1.bf16.msra.mxu0 0
    %2070 = vmatprep.subr.bf16.mxu0 0
    %2071 = vmatpush1.bf16.msra.mxu0 0
    %2072 = vmatprep.subr.bf16.mxu0 0
    %2073 = vmatpush1.bf16.msra.mxu0 0
    %2074 = vmatprep.subr.bf16.mxu0 0
    %2075 = vmatpush1.bf16.msra.mxu0 0
    %2076 = vmatprep.subr.bf16.mxu0 0
    %2077 = vmatpush1.bf16.msra.mxu0 0
    %2078 = vmatprep.subr.bf16.mxu0 0
    %2079 = vmatpush1.bf16.msra.mxu0 0
    %2080 = vmatprep.subr.bf16.mxu0 0
    %2081 = vmatpush1.bf16.msra.mxu0 0
    %2082 = vmatprep.subr.bf16.mxu0 0
    %2083 = vmatpush1.bf16.msra.mxu0 0
    %2084 = vmatprep.subr.bf16.mxu0 0
    %2085 = vmatpush1.bf16.msra.mxu0 0
    %2086 = vmatprep.subr.bf16.mxu0 0
    %2087 = vmatpush1.bf16.msra.mxu0 0
    %2088 = vmatprep.subr.bf16.mxu0 0
    %2089 = vmatpush1.bf16.msra.mxu0 0
    %2090 = vmatprep.subr.bf16.mxu0 0
    %2091 = vmatpush1.bf16.msra.mxu0 0
    %2092 = vmatprep.mubr.bf16.mxu0 0
    %2093 = vmatmul.mubr.bf16.gmra.mrb[0].mxu0 %v2058
    %v2094 = vpop.f32.mrb[0].mxu0
    %v2095 = vadd.f32 0.0, %v2094
    %v2096 = vpop.f32.mrb[0].mxu0
    %v2097 = vpop.f32.mrb[0].mxu0
    %v2098 = vadd.f32 0.0, %v2097
    %v2099 = vpop.f32.mrb[0].mxu0
    %2100 = vdwg.mxu0
    %2101 = vrot.lane.b32.xlu0 %v408, 16
    %v2102 = vpop.permute.xlu0 %2101
    %2103 = vrot.lane.b32.xlu0 %v410, 16
    %v2104 = vpop.permute.xlu0 %2103
    %v2106 = vsel %vm414, %v2102, 0
    %v2109 = vsel %vm414, %v2104, 0
    %2111 = vmatprep.subr.bf16.mxu0 0
    %2112 = vmatpush1.bf16.xpose.msra.mxu0 %v2109
    %2113 = vmatprep.subr.bf16.mxu0 0
    %2114 = vmatpush1.bf16.xpose.msra.mxu0 0
    %2115 = vmatprep.subr.bf16.mxu0 0
    %2116 = vmatpush1.bf16.xpose.msra.mxu0 0
    %2117 = vmatprep.subr.bf16.mxu0 0
    %2118 = vmatpush1.bf16.xpose.msra.mxu0 0
    %2119 = vmatprep.subr.bf16.mxu0 0
    %2120 = vmatpush1.bf16.xpose.msra.mxu0 0
    %2121 = vmatprep.subr.bf16.mxu0 0
    %2122 = vmatpush1.bf16.xpose.msra.mxu0 0
    %2123 = vmatprep.subr.bf16.mxu0 0
    %2124 = vmatpush1.bf16.xpose.msra.mxu0 0
    %2125 = vmatprep.subr.bf16.mxu0 0
    %2126 = vmatpush1.bf16.xpose.msra.mxu0 0
    %2127 = vmatprep.subr.bf16.mxu0 0
    %2128 = vmatpush1.bf16.xpose.msra.mxu0 0
    %2129 = vmatprep.subr.bf16.mxu0 0
    %2130 = vmatpush1.bf16.xpose.msra.mxu0 0
    %2131 = vmatprep.subr.bf16.mxu0 0
    %2132 = vmatpush1.bf16.xpose.msra.mxu0 0
    %2133 = vmatprep.subr.bf16.mxu0 0
    %2134 = vmatpush1.bf16.xpose.msra.mxu0 0
    %2135 = vmatprep.subr.bf16.mxu0 0
    %2136 = vmatpush1.bf16.xpose.msra.mxu0 0
    %2137 = vmatprep.subr.bf16.mxu0 0
    %2138 = vmatpush1.bf16.xpose.msra.mxu0 0
    %2139 = vmatprep.subr.bf16.mxu0 0
    %2140 = vmatpush1.bf16.xpose.msra.mxu0 0
    %2141 = vmatprep.subr.bf16.mxu0 0
    %2142 = vmatpush1.bf16.xpose.msra.mxu0 0
    %2143 = vmatprep.mubr.bf16.mxu0 0
    %2144 = vmatmul.mubr.bf16.gmra.mrb[0].mxu0 %v2106
    %v2145 = vpop.f32.mrb[0].mxu0
    %v2146 = vadd.f32 0.0, %v2145
    %v2147 = vpop.f32.mrb[0].mxu0
    %v2148 = vpop.f32.mrb[0].mxu0
    %v2149 = vadd.f32 0.0, %v2148
    %v2150 = vpop.f32.mrb[0].mxu0
    %2151 = vdwg.mxu0
    %2152 = vrot.lane.b32.xlu0 %v409, 16
    %v2153 = vpop.permute.xlu0 %2152
    %2154 = vrot.lane.b32.xlu0 %v412, 16
    %v2155 = vpop.permute.xlu0 %2154
    %v2157 = vsel %vm414, %v2153, 0
    %v2160 = vsel %vm414, %v2155, 0
    %2162 = vmatprep.subr.bf16.mxu0 0
    %2163 = vmatpush1.bf16.xpose.msra.mxu0 %v2160
    %2164 = vmatprep.subr.bf16.mxu0 0
    %2165 = vmatpush1.bf16.xpose.msra.mxu0 0
    %2166 = vmatprep.subr.bf16.mxu0 0
    %2167 = vmatpush1.bf16.xpose.msra.mxu0 0
    %2168 = vmatprep.subr.bf16.mxu0 0
    %2169 = vmatpush1.bf16.xpose.msra.mxu0 0
    %2170 = vmatprep.subr.bf16.mxu0 0
    %2171 = vmatpush1.bf16.xpose.msra.mxu0 0
    %2172 = vmatprep.subr.bf16.mxu0 0
    %2173 = vmatpush1.bf16.xpose.msra.mxu0 0
    %2174 = vmatprep.subr.bf16.mxu0 0
    %2175 = vmatpush1.bf16.xpose.msra.mxu0 0
    %2176 = vmatprep.subr.bf16.mxu0 0
    %2177 = vmatpush1.bf16.xpose.msra.mxu0 0
    %2178 = vmatprep.subr.bf16.mxu0 0
    %2179 = vmatpush1.bf16.xpose.msra.mxu0 0
    %2180 = vmatprep.subr.bf16.mxu0 0
    %2181 = vmatpush1.bf16.xpose.msra.mxu0 0
    %2182 = vmatprep.subr.bf16.mxu0 0
    %2183 = vmatpush1.bf16.xpose.msra.mxu0 0
    %2184 = vmatprep.subr.bf16.mxu0 0
    %2185 = vmatpush1.bf16.xpose.msra.mxu0 0
    %2186 = vmatprep.subr.bf16.mxu0 0
    %2187 = vmatpush1.bf16.xpose.msra.mxu0 0
    %2188 = vmatprep.subr.bf16.mxu0 0
    %2189 = vmatpush1.bf16.xpose.msra.mxu0 0
    %2190 = vmatprep.subr.bf16.mxu0 0
    %2191 = vmatpush1.bf16.xpose.msra.mxu0 0
    %2192 = vmatprep.subr.bf16.mxu0 0
    %2193 = vmatpush1.bf16.xpose.msra.mxu0 0
    %2194 = vmatprep.mubr.bf16.mxu0 0
    %2195 = vmatmul.mubr.bf16.gmra.mrb[0].mxu0 %v2157
    %v2196 = vpop.f32.mrb[0].mxu0
    %v2197 = vadd.f32 0.0, %v2196
    %v2198 = vpop.f32.mrb[0].mxu0
    %v2199 = vpop.f32.mrb[0].mxu0
    %v2200 = vadd.f32 0.0, %v2199
    %v2201 = vpop.f32.mrb[0].mxu0
    %2202 = vdwg.mxu0
    %v2203 = vsel %vm414, %v2146, -inf
    %2204 = vmax.xlane.f32.xlu0 %v2203
    %v2205 = vpop.xlane.xlu0 %2204
    %v2206 = vsel %vm414, %v2149, -inf
    %2207 = vmax.xlane.f32.xlu0 %v2206
    %v2208 = vpop.xlane.xlu0 %2207
    %v2209 = vsel %vm414, %v2197, -inf
    %2210 = vmax.xlane.f32.xlu0 %v2209
    %v2211 = vpop.xlane.xlu0 %2210
    %v2212 = vsel %vm414, %v2200, -inf
    %2213 = vmax.xlane.f32.xlu0 %v2212
    %v2214 = vpop.xlane.xlu0 %2213
    %v2215 = vsub.f32 %v2146, %v2205
    %v2216 = vsub.f32 %v2149, %v2208
    %v2217 = vsub.f32 %v2197, %v2211
    %v2218 = vsub.f32 %v2200, %v2214
    %v2219 = vmul.f32 %v2215, 1.442695
    %v2220 = vpow.pop %v2219
    %v2221 = vmul.f32 %v2216, 1.442695
    %v2222 = vpow.pop %v2221
    %v2223 = vmul.f32 %v2217, 1.442695
    %v2224 = vpow.pop %v2223
    %v2225 = vmul.f32 %v2218, 1.442695
    %v2226 = vpow.pop %v2225
    %v2227 = vsel %vm414, %v2220, 0.0
    %2228 = vadd.xlane.f32.xlu0 %v2227
    %v2229 = vpop.xlane.xlu0 %2228
    %v2230 = vsel %vm414, %v2222, 0.0
    %2231 = vadd.xlane.f32.xlu0 %v2230
    %v2232 = vpop.xlane.xlu0 %2231
    %v2233 = vsel %vm414, %v2224, 0.0
    %2234 = vadd.xlane.f32.xlu0 %v2233
    %v2235 = vpop.xlane.xlu0 %2234
    %v2236 = vsel %vm414, %v2226, 0.0
    %2237 = vadd.xlane.f32.xlu0 %v2236
    %v2238 = vpop.xlane.xlu0 %2237
    %v2239 = vrcp.pop %v2229
    %v2240 = vrcp.pop %v2232
    %v2241 = vrcp.pop %v2235
    %v2242 = vrcp.pop %v2238
    %v2243 = vmul.f32 %v2220, %v2239
    %v2244 = vmul.f32 %v2222, %v2240
    %v2245 = vmul.f32 %v2224, %v2241
    %v2246 = vmul.f32 %v2226, %v2242
    %v2247 = vpack.c.bf16 %v2244, %v2243
    %v2248 = vpack.c.bf16 %v2246, %v2245
    %2249 = vrot.lane.b32.xlu0 %v411, 16
    %v2250 = vpop.permute.xlu0 %2249
    %v2253 = vsel %vm414, %v2247, 0
    %2255 = vmatprep.subr.bf16.mxu0 0
    %2256 = vmatpush1.bf16.msra.mxu0 %v2250
    %2257 = vmatprep.subr.bf16.mxu0 0
    %2258 = vmatpush1.bf16.msra.mxu0 0
    %2259 = vmatprep.subr.bf16.mxu0 0
    %2260 = vmatpush1.bf16.msra.mxu0 0
    %2261 = vmatprep.subr.bf16.mxu0 0
    %2262 = vmatpush1.bf16.msra.mxu0 0
    %2263 = vmatprep.subr.bf16.mxu0 0
    %2264 = vmatpush1.bf16.msra.mxu0 0
    %2265 = vmatprep.subr.bf16.mxu0 0
    %2266 = vmatpush1.bf16.msra.mxu0 0
    %2267 = vmatprep.subr.bf16.mxu0 0
    %2268 = vmatpush1.bf16.msra.mxu0 0
    %2269 = vmatprep.subr.bf16.mxu0 0
    %2270 = vmatpush1.bf16.msra.mxu0 0
    %2271 = vmatprep.subr.bf16.mxu0 0
    %2272 = vmatpush1.bf16.msra.mxu0 0
    %2273 = vmatprep.subr.bf16.mxu0 0
    %2274 = vmatpush1.bf16.msra.mxu0 0
    %2275 = vmatprep.subr.bf16.mxu0 0
    %2276 = vmatpush1.bf16.msra.mxu0 0
    %2277 = vmatprep.subr.bf16.mxu0 0
    %2278 = vmatpush1.bf16.msra.mxu0 0
    %2279 = vmatprep.subr.bf16.mxu0 0
    %2280 = vmatpush1.bf16.msra.mxu0 0
    %2281 = vmatprep.subr.bf16.mxu0 0
    %2282 = vmatpush1.bf16.msra.mxu0 0
    %2283 = vmatprep.subr.bf16.mxu0 0
    %2284 = vmatpush1.bf16.msra.mxu0 0
    %2285 = vmatprep.subr.bf16.mxu0 0
    %2286 = vmatpush1.bf16.msra.mxu0 0
    %2287 = vmatprep.mubr.bf16.mxu0 0
    %2288 = vmatmul.mubr.bf16.gmra.mrb[0].mxu0 %v2253
    %v2289 = vpop.f32.mrb[0].mxu0
    %v2290 = vadd.f32 0.0, %v2289
    %v2291 = vpop.f32.mrb[0].mxu0
    %v2292 = vpop.f32.mrb[0].mxu0
    %v2293 = vadd.f32 0.0, %v2292
    %v2294 = vpop.f32.mrb[0].mxu0
    %2295 = vdwg.mxu0
    %2296 = vrot.lane.b32.xlu0 %v413, 16
    %v2297 = vpop.permute.xlu0 %2296
    %v2300 = vsel %vm414, %v2248, 0
    %2302 = vmatprep.subr.bf16.mxu0 0
    %2303 = vmatpush1.bf16.msra.mxu0 %v2297
    %2304 = vmatprep.subr.bf16.mxu0 0
    %2305 = vmatpush1.bf16.msra.mxu0 0
    %2306 = vmatprep.subr.bf16.mxu0 0
    %2307 = vmatpush1.bf16.msra.mxu0 0
    %2308 = vmatprep.subr.bf16.mxu0 0
    %2309 = vmatpush1.bf16.msra.mxu0 0
    %2310 = vmatprep.subr.bf16.mxu0 0
    %2311 = vmatpush1.bf16.msra.mxu0 0
    %2312 = vmatprep.subr.bf16.mxu0 0
    %2313 = vmatpush1.bf16.msra.mxu0 0
    %2314 = vmatprep.subr.bf16.mxu0 0
    %2315 = vmatpush1.bf16.msra.mxu0 0
    %2316 = vmatprep.subr.bf16.mxu0 0
    %2317 = vmatpush1.bf16.msra.mxu0 0
    %2318 = vmatprep.subr.bf16.mxu0 0
    %2319 = vmatpush1.bf16.msra.mxu0 0
    %2320 = vmatprep.subr.bf16.mxu0 0
    %2321 = vmatpush1.bf16.msra.mxu0 0
    %2322 = vmatprep.subr.bf16.mxu0 0
    %2323 = vmatpush1.bf16.msra.mxu0 0
    %2324 = vmatprep.subr.bf16.mxu0 0
    %2325 = vmatpush1.bf16.msra.mxu0 0
    %2326 = vmatprep.subr.bf16.mxu0 0
    %2327 = vmatpush1.bf16.msra.mxu0 0
    %2328 = vmatprep.subr.bf16.mxu0 0
    %2329 = vmatpush1.bf16.msra.mxu0 0
    %2330 = vmatprep.subr.bf16.mxu0 0
    %2331 = vmatpush1.bf16.msra.mxu0 0
    %2332 = vmatprep.subr.bf16.mxu0 0
    %2333 = vmatpush1.bf16.msra.mxu0 0
    %2334 = vmatprep.mubr.bf16.mxu0 0
    %2335 = vmatmul.mubr.bf16.gmra.mrb[0].mxu0 %v2300
    %v2336 = vpop.f32.mrb[0].mxu0
    %v2337 = vadd.f32 0.0, %v2336
    %v2338 = vpop.f32.mrb[0].mxu0
    %v2339 = vpop.f32.mrb[0].mxu0
    %v2340 = vadd.f32 0.0, %v2339
    %v2341 = vpop.f32.mrb[0].mxu0
    %2342 = vdwg.mxu0
    %2347 = vrot.lane.b32.xlu0 %v837, 16
    %v2348 = vpop.permute.xlu0 %2347
    %2349 = vrot.lane.b32.xlu0 %v840, 16
    %v2350 = vpop.permute.xlu0 %2349
    %2351 = vrot.lane.b32.xlu0 %v885, 16
    %v2352 = vpop.permute.xlu0 %2351
    %2353 = vrot.lane.b32.xlu0 %v888, 16
    %v2354 = vpop.permute.xlu0 %2353
    %2363 = vrot.lane.b32.xlu0 %v1080, 32
    %v2364 = vpop.permute.xlu0 %2363
    %2365 = vrot.lane.b32.xlu0 %v1083, 32
    %v2366 = vpop.permute.xlu0 %2365
    %2367 = vrot.lane.b32.xlu0 %v1127, 32
    %v2368 = vpop.permute.xlu0 %2367
    %2369 = vrot.lane.b32.xlu0 %v1130, 32
    %v2370 = vpop.permute.xlu0 %2369
    %2379 = vrot.lane.b32.xlu0 %v1322, 48
    %v2380 = vpop.permute.xlu0 %2379
    %2381 = vrot.lane.b32.xlu0 %v1325, 48
    %v2382 = vpop.permute.xlu0 %2381
    %2383 = vrot.lane.b32.xlu0 %v1369, 48
    %v2384 = vpop.permute.xlu0 %2383
    %2385 = vrot.lane.b32.xlu0 %v1372, 48
    %v2386 = vpop.permute.xlu0 %2385
    %2395 = vrot.lane.b32.xlu0 %v1564, 64
    %v2396 = vpop.permute.xlu0 %2395
    %2397 = vrot.lane.b32.xlu0 %v1567, 64
    %v2398 = vpop.permute.xlu0 %2397
    %2399 = vrot.lane.b32.xlu0 %v1611, 64
    %v2400 = vpop.permute.xlu0 %2399
    %2401 = vrot.lane.b32.xlu0 %v1614, 64
    %v2402 = vpop.permute.xlu0 %2401
    %2411 = vrot.lane.b32.xlu0 %v1806, 80
    %v2412 = vpop.permute.xlu0 %2411
    %2413 = vrot.lane.b32.xlu0 %v1809, 80
    %v2414 = vpop.permute.xlu0 %2413
    %2415 = vrot.lane.b32.xlu0 %v1853, 80
    %v2416 = vpop.permute.xlu0 %2415
    %2417 = vrot.lane.b32.xlu0 %v1856, 80
    %v2418 = vpop.permute.xlu0 %2417
    %2427 = vrot.lane.b32.xlu0 %v2048, 96
    %v2428 = vpop.permute.xlu0 %2427
    %2429 = vrot.lane.b32.xlu0 %v2051, 96
    %v2430 = vpop.permute.xlu0 %2429
    %2431 = vrot.lane.b32.xlu0 %v2095, 96
    %v2432 = vpop.permute.xlu0 %2431
    %2433 = vrot.lane.b32.xlu0 %v2098, 96
    %v2434 = vpop.permute.xlu0 %2433
    %2443 = vrot.lane.b32.xlu0 %v2290, 112
    %v2444 = vpop.permute.xlu0 %2443
    %2445 = vrot.lane.b32.xlu0 %v2293, 112
    %v2446 = vpop.permute.xlu0 %2445
    %2447 = vrot.lane.b32.xlu0 %v2337, 112
    %v2448 = vpop.permute.xlu0 %2447
    %2449 = vrot.lane.b32.xlu0 %v2340, 112
    %v2450 = vpop.permute.xlu0 %2449
    %v2455 = vsel %vm414, %v593, %v2348
    %v2456 = vsel %vm414, %v596, %v2350
    %v2457 = vsel %vm414, %v637, %v2352
    %v2458 = vsel %vm414, %v640, %v2354
    %vm2459 = vcmask 261120
    %v2460 = vsel %vm2459, %v2455, %v2364
    %v2461 = vsel %vm2459, %v2456, %v2366
    %v2462 = vsel %vm2459, %v2457, %v2368
    %v2463 = vsel %vm2459, %v2458, %v2370
    %vm2464 = vcmask 392192
    %v2465 = vsel %vm2464, %v2460, %v2380
    %v2466 = vsel %vm2464, %v2461, %v2382
    %v2467 = vsel %vm2464, %v2462, %v2384
    %v2468 = vsel %vm2464, %v2463, %v2386
    %vm2469 = vcmask 523264
    %v2470 = vsel %vm2469, %v2465, %v2396
    %v2471 = vsel %vm2469, %v2466, %v2398
    %v2472 = vsel %vm2469, %v2467, %v2400
    %v2473 = vsel %vm2469, %v2468, %v2402
    %vm2474 = vcmask 654336
    %v2475 = vsel %vm2474, %v2470, %v2412
    %v2476 = vsel %vm2474, %v2471, %v2414
    %v2477 = vsel %vm2474, %v2472, %v2416
    %v2478 = vsel %vm2474, %v2473, %v2418
    %vm2479 = vcmask 785408
    %v2480 = vsel %vm2479, %v2475, %v2428
    %v2481 = vsel %vm2479, %v2476, %v2430
    %v2482 = vsel %vm2479, %v2477, %v2432
    %v2483 = vsel %vm2479, %v2478, %v2434
    %vm2484 = vcmask 916480
    %v2485 = vsel %vm2484, %v2480, %v2444
    %v2486 = vsel %vm2484, %v2481, %v2446
    %v2487 = vsel %vm2484, %v2482, %v2448
    %v2488 = vsel %vm2484, %v2483, %v2450
    %v2489 = vpack.c.bf16 %v2486, %v2485
    %v2490 = vpack.c.bf16 %v2488, %v2487
    %v2492 = vlaneseq
    %v2493 = vshrl.u32 %v2492, 7
    %v2494 = vsub.s32 0, %v2493
    %v2495 = vrot.slane %v141, %v2494
    %v2513 = vunpack.c.l.b16 %v125
    %v2514 = vunpack.c.l.b16 %v126
    %v2515 = vunpack.c.l.b16 %v127
    %v2516 = vunpack.c.l.b16 %v128
    %v2517 = vunpack.c.l.b16 %v129
    %v2518 = vunpack.c.l.b16 %v130
    %v2519 = vunpack.c.l.b16 %v131
    %v2520 = vunpack.c.l.b16 %v132
    %v2521 = vunpack.c.l.b16 %v133
    %v2522 = vunpack.c.l.b16 %v134
    %v2523 = vunpack.c.l.b16 %v135
    %v2524 = vunpack.c.l.b16 %v136
    %v2525 = vunpack.c.l.b16 %v137
    %v2526 = vunpack.c.l.b16 %v138
    %v2527 = vunpack.c.l.b16 %v139
    %v2528 = vunpack.c.l.b16 %v140
    %v2529 = vpack.c.b16 %v2514, %v2513
    %v2530 = vpack.c.b16 %v2516, %v2515
    %v2531 = vpack.c.b16 %v2518, %v2517
    %v2532 = vpack.c.b16 %v2520, %v2519
    %v2533 = vpack.c.b16 %v2522, %v2521
    %v2534 = vpack.c.b16 %v2524, %v2523
    %v2535 = vpack.c.b16 %v2526, %v2525
    %v2536 = vpack.c.b16 %v2528, %v2527
    %2545 = vmatprep.subr.bf16.mxu0 0
    %2546 = vmatpush1.bf16.msra.mxu0 %v2529
    %2547 = vmatprep.subr.bf16.mxu0 0
    %2548 = vmatpush1.bf16.msra.mxu0 %v2530
    %2549 = vmatprep.subr.bf16.mxu0 0
    %2550 = vmatpush1.bf16.msra.mxu0 %v2531
    %2551 = vmatprep.subr.bf16.mxu0 0
    %2552 = vmatpush1.bf16.msra.mxu0 %v2532
    %2553 = vmatprep.subr.bf16.mxu0 0
    %2554 = vmatpush1.bf16.msra.mxu0 %v2533
    %2555 = vmatprep.subr.bf16.mxu0 0
    %2556 = vmatpush1.bf16.msra.mxu0 %v2534
    %2557 = vmatprep.subr.bf16.mxu0 0
    %2558 = vmatpush1.bf16.msra.mxu0 %v2535
    %2559 = vmatprep.subr.bf16.mxu0 0
    %2560 = vmatpush1.bf16.msra.mxu0 %v2536
    %2561 = vmatprep.subr.bf16.mxu0 0
    %2562 = vmatpush1.bf16.msra.mxu0 0
    %2563 = vmatprep.subr.bf16.mxu0 0
    %2564 = vmatpush1.bf16.msra.mxu0 0
    %2565 = vmatprep.subr.bf16.mxu0 0
    %2566 = vmatpush1.bf16.msra.mxu0 0
    %2567 = vmatprep.subr.bf16.mxu0 0
    %2568 = vmatpush1.bf16.msra.mxu0 0
    %2569 = vmatprep.subr.bf16.mxu0 0
    %2570 = vmatpush1.bf16.msra.mxu0 0
    %2571 = vmatprep.subr.bf16.mxu0 0
    %2572 = vmatpush1.bf16.msra.mxu0 0
    %2573 = vmatprep.subr.bf16.mxu0 0
    %2574 = vmatpush1.bf16.msra.mxu0 0
    %2575 = vmatprep.subr.bf16.mxu0 0
    %2576 = vmatpush1.bf16.msra.mxu0 0
    %2577 = vmatprep.mubr.bf16.mxu0 0
    %2578 = vmatmul.mubr.bf16.gmra.mrb[0].mxu0 %v2489
    %v2579 = vpop.f32.mrb[0].mxu0
    %v2580 = vadd.f32 %v2495, %v2579
    %v2581 = vpop.f32.mrb[0].mxu0
    %v2582 = vpop.f32.mrb[0].mxu0
    %v2583 = vadd.f32 %v2495, %v2582
    %v2584 = vpop.f32.mrb[0].mxu0
    %2585 = vmatprep.mubr.bf16.mxu0 0
    %2586 = vmatmul.mubr.bf16.gmra.mrb[0].mxu0 %v2490
    %v2587 = vpop.f32.mrb[0].mxu0
    %v2588 = vadd.f32 %v2495, %v2587
    %v2589 = vpop.f32.mrb[0].mxu0
    %v2590 = vpop.f32.mrb[0].mxu0
    %v2591 = vadd.f32 %v2495, %v2590
    %v2592 = vpop.f32.mrb[0].mxu0
    %2593 = vdwg.mxu0
    %2594 = vst [vmem:[#allocation11] sm:$0xff] %v2580
    %2595 = vst [vmem:[#allocation11 + $0x8] sm:$0xff] %v2583
    %2596 = vst [vmem:[#allocation11 + $0x10] sm:$0xff] %v2588
    %2597 = vst [vmem:[#allocation11 + $0x18] sm:$0xff] %v2591
    // Predicated region
    $region46: #{tpu_custom_call.1} parent=1 // pred_check
      _
    $region47: #{tpu_custom_call.1} parent=1 // pred_check_branch
      %2599 = sbr.rel (0) target = $region49
    $region48: #{tpu_custom_call.1} parent=1 // pred_region
      %s2601 = ssub.s32 512, 512
      %2602 = vsyncadd [#allocation4], %s2601
      %s2603 = sshll.u32 [#allocation11], 4
      %s2604 = int_to_ptr.vmem [resolvable:$true] %s2603
      %2609 = dma.vmem_to_hbm [thread:$0]  %s2604, 512, %s6, [#allocation4], 128, 128, 8
    $region49: #{tpu_custom_call.1} parent=1 // pred_fallthru
      _
    // Predicated region
    $region50: #{tpu_custom_call.1} parent=1 // pred_check
      _
    $region51: #{tpu_custom_call.1} parent=1 // pred_check_branch
      %2611 = sbr.rel (0) target = $region53
    $region52: #{tpu_custom_call.1} parent=1 // pred_region
      %2612 = dma.done [#allocation4], 512
    $region53: #{tpu_custom_call.1} parent=1 // pred_fallthru
      _
    %2613 = vsyncpa [#allocation3], 1
    %2614 = vsyncpa [#allocation6], 1
    %2615 = vsyncpa [#allocation9], 1
    %2616 = vsyncpa [#allocation4], 1

</llo_original>
